<compile_context>
chip_gen: v6e
topology: v6e:2x2x1
jax: 0.10.0
libtpu: 0.0.40
codegen_flags: <defaults>
</compile_context>

<pallas_src>
import numpy as np
import jax
import jax.numpy as jnp
from jax import lax
from jax.experimental import pallas as pl
from jax.experimental.pallas import tpu as pltpu

BN_EPS = 1e-5


def _round_up(x, m):
    return (x + m - 1) // m * m


def _fold_bn(gamma, beta, mean, var, eps=BN_EPS):
    scale = gamma / jnp.sqrt(var + eps)
    return scale, beta - mean * scale


# ---------------------------------------------------------------------------
# Host-side helper: per-tap source-index table (used for direction-agnostic
# shift selection inside the kernel).  Row 0 = flat position p, rows 1..8 =
# wanted source index p' for each non-centre 3x3 tap (-1 where the tap is
# out of range, which never matches a rolled index).
# ---------------------------------------------------------------------------
def _make_tap_index_table(H, W):
    N = H * W
    hh, ww = np.divmod(np.arange(N), W)
    rows = [np.arange(N, dtype=np.int32)]
    for dy in range(3):
        for dx in range(3):
            if (dy, dx) == (1, 1):
                continue
            sy, sx = hh + dy - 1, ww + dx - 1
            valid = (sy >= 0) & (sy < H) & (sx >= 0) & (sx < W)
            rows.append(np.where(valid, sy * W + sx, -1).astype(np.int32))
    return jnp.asarray(np.stack(rows, axis=0))  # (9, N) int32


# ---------------------------------------------------------------------------
# Fused OSA kernel factory
# ---------------------------------------------------------------------------
def _make_osa_kernel(L, H, W, concat_ch, identity):
    N = H * W
    taps = [(dy, dx) for dy in range(3) for dx in range(3)]
    # distinct lane-roll amounts needed for the 8 non-centre taps (both signs)
    amounts = sorted({a for dy, dx in taps if (dy, dx) != (1, 1)
                      for a in (((dy - 1) * W + (dx - 1)) % N,
                                (-((dy - 1) * W + (dx - 1))) % N)})

    def kernel(x_ref, idx_ref, *refs):
        w3_refs = refs[0:L]                     # (stage, 9*Cin_l) each
        b3_refs = refs[L:2 * L]                 # (stage, 1) each
        wc_refs = refs[2 * L:3 * L + 1]         # (concat_ch, C_s) chunks
        bc_ref = refs[3 * L + 1]                # (concat_ch, 1)
        o_ref = refs[3 * L + 2]                 # (1, concat_ch, N)

        x = x_ref[0].astype(jnp.float32)        # (Cin_p, N), lane-dense

        # ---- precompute tap-selector masks (roll-direction agnostic) ----
        idx = idx_ref[...]                      # (9, N) int32
        pos = idx[0:1, :]
        rolled_pos = {a: pltpu.roll(pos, a, axis=1) for a in amounts}
        sel = {}
        r = 1
        for dy, dx in taps:
            d = (dy - 1) * W + (dx - 1)
            if d == 0:
                continue
            src = idx[r:r + 1, :]               # wanted source position (or -1)
            r += 1
            a_f, a_b = d % N, (-d) % N
            sel[(dy, dx)] = (a_f, rolled_pos[a_f] == src,
                             a_b, rolled_pos[a_b] == src)

        # ---- fused "concat -> 1x1" accumulator: chunk 0 is the block input ----
        acc = jnp.dot(wc_refs[0][...], x, preferred_element_type=jnp.float32)

        cur = x
        for l in range(L):
            # build the 9 shifted taps with lane rolls + masks, stack on sublanes
            rolled = {a: pltpu.roll(cur, a, axis=1) for a in amounts}
            tap_list = []
            for dy, dx in taps:
                if (dy, dx) == (1, 1):
                    tap_list.append(cur)
                else:
                    a_f, m_f, a_b, m_b = sel[(dy, dx)]
                    tap_list.append(
                        jnp.where(m_f, rolled[a_f],
                                  jnp.where(m_b, rolled[a_b], 0.0)))
            patches = jnp.concatenate(tap_list, axis=0)      # (9*C_l, N)

            # single MXU matmul with K = 9*C_l (BN scale already in the weight)
            feat = jnp.dot(w3_refs[l][...], patches,
                           preferred_element_type=jnp.float32)
            feat = jnp.maximum(feat + b3_refs[l][...], 0.0)  # (stage, N)

            # accumulate this feature map's 1x1-conv contribution (no concat)
            acc = acc + jnp.dot(wc_refs[l + 1][...], feat,
                                preferred_element_type=jnp.float32)
            cur = feat

        y = jnp.maximum(acc + bc_ref[...], 0.0)              # (concat_ch, N)
        if identity:
            y = y + x[0:concat_ch, :]                        # concat_ch == in_ch
        o_ref[0] = y.astype(o_ref.dtype)                     # lane-dense store

    return kernel


# ---------------------------------------------------------------------------
# Wrapper: host-side weight folding / packing + pallas_call
# ---------------------------------------------------------------------------
def osa_forward(x_nchw, params, identity=False):
    """Fused _OSA_module forward. x_nchw: (B, in_ch, H, W) float32 (NCHW)."""
    B, in_ch, H, W = x_nchw.shape
    N = H * W
    L = len(params["layers"])
    stage_ch = params["layers"][0][0].shape[-1]
    concat_ch = params["concat"][0].shape[-1]
    assert stage_ch % 8 == 0, "stage_ch must be a multiple of 8"
    if identity:
        assert concat_ch == in_ch, "identity branch requires concat_ch == in_ch"
    cin_p = _round_up(in_ch, 8)  # pad input channels to the sublane tile

    # ---- fold BN scale into conv weights; reshape for the fused kernel ----
    w3_list, b3_list = [], []
    c_prev, c_prev_p = in_ch, cin_p
    for (w_hwio, gamma, beta, mean, var) in params["layers"]:
        scale, bias = _fold_bn(gamma, beta, mean, var)
        w = w_hwio * scale                                       # (3,3,c,stage)
        if c_prev_p != c_prev:
            w = jnp.pad(w, ((0, 0), (0, 0), (0, c_prev_p - c_prev), (0, 0)))
        w3_list.append(w.reshape(9 * c_prev_p, stage_ch).T)      # (stage, 9*Cp)
        b3_list.append(bias.reshape(stage_ch, 1))
        c_prev = c_prev_p = stage_ch

    wc, gamma, beta, mean, var = params["concat"]
    scale, bias = _fold_bn(gamma, beta, mean, var)
    wct = (wc * scale).T                                         # (concat_ch, Cin_total)
    wc_chunks = []
    c0 = wct[:, :in_ch]
    if cin_p != in_ch:
        c0 = jnp.pad(c0, ((0, 0), (0, cin_p - in_ch)))
    wc_chunks.append(c0)
    for l in range(L):
        s = in_ch + l * stage_ch
        wc_chunks.append(wct[:, s:s + stage_ch])
    bc = bias.reshape(concat_ch, 1)

    # ---- activations: NCHW -> (B, Cin_p, H*W) (spatial on the lane axis) ----
    x_flat = x_nchw.reshape(B, in_ch, N)
    if cin_p != in_ch:
        x_flat = jnp.pad(x_flat, ((0, 0), (0, cin_p - in_ch), (0, 0)))

    idx_tbl = _make_tap_index_table(H, W)                        # (9, N) int32

    kernel = _make_osa_kernel(L, H, W, concat_ch, identity)

    def _full_spec(arr):
        nd = arr.ndim
        return pl.BlockSpec(arr.shape, lambda b, _nd=nd: (0,) * _nd)

    in_specs = ([pl.BlockSpec((1, cin_p, N), lambda b: (b, 0, 0)),
                 _full_spec(idx_tbl)]
                + [_full_spec(a) for a in w3_list]
                + [_full_spec(a) for a in b3_list]
                + [_full_spec(a) for a in wc_chunks]
                + [_full_spec(bc)])

    out = pl.pallas_call(
        kernel,
        out_shape=jax.ShapeDtypeStruct((B, concat_ch, N), x_nchw.dtype),
        grid_spec=pltpu.PrefetchScalarGridSpec(
            num_scalar_prefetch=0,
            grid=(B,),
            in_specs=in_specs,
            out_specs=pl.BlockSpec((1, concat_ch, N), lambda b: (b, 0, 0)),
        ),
        compiler_params=pltpu.CompilerParams(
            dimension_semantics=("parallel",),
            vmem_limit_bytes=32 * 1024 * 1024,
        ),
    )(x_flat, idx_tbl, *w3_list, *b3_list, *wc_chunks, bc)

    return out.reshape(B, concat_ch, H, W)


# ---------------------------------------------------------------------------
# Parameter construction (deterministic, synthetic) and pure-JAX reference
# ---------------------------------------------------------------------------
def make_osa_params(key, in_ch, stage_ch, concat_ch, layer_per_block):
    params = {"layers": [], "concat": None}
    c = in_ch
    for i in range(layer_per_block):
        k = jax.random.fold_in(key, i)
        kw, kg, kb, km, kv = jax.random.split(k, 5)
        w = 0.1 * jax.random.normal(kw, (3, 3, c, stage_ch), jnp.float32)
        gamma = 1.0 + 0.1 * jax.random.normal(kg, (stage_ch,), jnp.float32)
        beta = 0.05 * jax.random.normal(kb, (stage_ch,), jnp.float32)
        mean = 0.1 * jax.random.normal(km, (stage_ch,), jnp.float32)
        var = jax.random.uniform(kv, (stage_ch,), jnp.float32, 0.5, 1.5)
        params["layers"].append((w, gamma, beta, mean, var))
        c = stage_ch
    cin_total = in_ch + layer_per_block * stage_ch
    k = jax.random.fold_in(key, 1000)
    kw, kg, kb, km, kv = jax.random.split(k, 5)
    wc = 0.1 * jax.random.normal(kw, (cin_total, concat_ch), jnp.float32)
    gamma = 1.0 + 0.1 * jax.random.normal(kg, (concat_ch,), jnp.float32)
    beta = 0.05 * jax.random.normal(kb, (concat_ch,), jnp.float32)
    mean = 0.1 * jax.random.normal(km, (concat_ch,), jnp.float32)
    var = jax.random.uniform(kv, (concat_ch,), jnp.float32, 0.5, 1.5)
    params["concat"] = (wc, gamma, beta, mean, var)
    return params


def osa_forward_ref(x_nchw, params, identity=False):
    dn = ("NCHW", "HWIO", "NCHW")

    def cbr(x, w, gamma, beta, mean, var):
        scale, bias = _fold_bn(gamma, beta, mean, var)
        y = lax.conv_general_dilated(x, w, (1, 1), "SAME", dimension_numbers=dn)
        return jnp.maximum(y * scale[None, :, None, None]
                           + bias[None, :, None, None], 0.0)

    feats = [x_nchw]
    cur = x_nchw
    for (w, gamma, beta, mean, var) in params["layers"]:
        cur = cbr(cur, w, gamma, beta, mean, var)
        feats.append(cur)
    cat = jnp.concatenate(feats, axis=1)
    wc, gamma, beta, mean, var = params["concat"]
    scale, bias = _fold_bn(gamma, beta, mean, var)
    y = jnp.einsum("bchw,cd->bdhw", cat, wc)
    y = jnp.maximum(y * scale[None, :, None, None]
                    + bias[None, :, None, None], 0.0)
    if identity:
        y = y + x_nchw
    return y


# ---------------------------------------------------------------------------
if __name__ == "__main__":
    key = jax.random.PRNGKey(0)

    # Config A: PyTorch NCHW input (2, 4, 16, 16), no identity branch.
    B, in_ch, H, W = 2, 4, 16, 16
    stage_ch, concat_ch, L = 8, 16, 3
    kx, kp = jax.random.split(key)
    x = jax.random.normal(kx, (B, in_ch, H, W), jnp.float32)
    params = make_osa_params(kp, in_ch, stage_ch, concat_ch, L)

    out = jax.block_until_ready(osa_forward(x, params, identity=False))
    ref = osa_forward_ref(x, params, identity=False)
    np.testing.assert_allclose(np.asarray(out), np.asarray(ref),
                               rtol=1e-4, atol=1e-4)

    # Config B: identity branch (requires concat_ch == in_ch).
    in_ch_b = concat_ch_b = 16
    kx2, kp2 = jax.random.split(jax.random.fold_in(key, 7))
    x2 = jax.random.normal(kx2, (B, in_ch_b, H, W), jnp.float32)
    params2 = make_osa_params(kp2, in_ch_b, stage_ch, concat_ch_b, L)

    out2 = jax.block_until_ready(osa_forward(x2, params2, identity=True))
    ref2 = osa_forward_ref(x2, params2, identity=True)
    np.testing.assert_allclose(np.asarray(out2), np.asarray(ref2),
                               rtol=1e-4, atol=1e-4)

    print("KERNEL_OK")
</pallas_src>

<mosaic_0001>
module attributes {stable_mosaic.version = 11 : i64} {
  func.func @kernel(%arg0: i32, %arg1: memref<1x8x256xf32, #tpu.memory_space<vmem>>, %arg2: memref<9x256xi32, #tpu.memory_space<vmem>>, %arg3: memref<8x72xf32, #tpu.memory_space<vmem>>, %arg4: memref<8x72xf32, #tpu.memory_space<vmem>>, %arg5: memref<8x72xf32, #tpu.memory_space<vmem>>, %arg6: memref<8x1xf32, #tpu.memory_space<vmem>>, %arg7: memref<8x1xf32, #tpu.memory_space<vmem>>, %arg8: memref<8x1xf32, #tpu.memory_space<vmem>>, %arg9: memref<16x8xf32, #tpu.memory_space<vmem>>, %arg10: memref<16x8xf32, #tpu.memory_space<vmem>>, %arg11: memref<16x8xf32, #tpu.memory_space<vmem>>, %arg12: memref<16x8xf32, #tpu.memory_space<vmem>>, %arg13: memref<16x1xf32, #tpu.memory_space<vmem>>, %arg14: memref<1x16x256xf32, #tpu.memory_space<vmem>>) attributes {dimension_semantics = [#tpu.dimension_semantics<parallel>], iteration_bounds = array<i64: 2>, scalar_prefetch = 0 : i64, scratch_operands = 0 : i64, tpu.core_type = #tpu.core_type<tc>, window_params = [{transform_indices = @transform_0, window_bounds = array<i64: 1, 8, 256>}, {pipeline_mode = #tpu.pipeline_mode<synchronous>, transform_indices = @transform_1, window_bounds = array<i64: 9, 256>}, {pipeline_mode = #tpu.pipeline_mode<synchronous>, transform_indices = @transform_2, window_bounds = array<i64: 8, 72>}, {pipeline_mode = #tpu.pipeline_mode<synchronous>, transform_indices = @transform_3, window_bounds = array<i64: 8, 72>}, {pipeline_mode = #tpu.pipeline_mode<synchronous>, transform_indices = @transform_4, window_bounds = array<i64: 8, 72>}, {pipeline_mode = #tpu.pipeline_mode<synchronous>, transform_indices = @transform_5, window_bounds = array<i64: 8, 1>}, {pipeline_mode = #tpu.pipeline_mode<synchronous>, transform_indices = @transform_6, window_bounds = array<i64: 8, 1>}, {pipeline_mode = #tpu.pipeline_mode<synchronous>, transform_indices = @transform_7, window_bounds = array<i64: 8, 1>}, {pipeline_mode = #tpu.pipeline_mode<synchronous>, transform_indices = @transform_8, window_bounds = array<i64: 16, 8>}, {pipeline_mode = #tpu.pipeline_mode<synchronous>, transform_indices = @transform_9, window_bounds = array<i64: 16, 8>}, {pipeline_mode = #tpu.pipeline_mode<synchronous>, transform_indices = @transform_10, window_bounds = array<i64: 16, 8>}, {pipeline_mode = #tpu.pipeline_mode<synchronous>, transform_indices = @transform_11, window_bounds = array<i64: 16, 8>}, {pipeline_mode = #tpu.pipeline_mode<synchronous>, transform_indices = @transform_12, window_bounds = array<i64: 16, 1>}, {transform_indices = @transform_13, window_bounds = array<i64: 1, 16, 256>}]} {
    %c0 = arith.constant 0 : index
    %c0_0 = arith.constant 0 : index
    %c0_1 = arith.constant 0 : index
    %0 = vector.load %arg1[%c0, %c0_0, %c0_1] : memref<1x8x256xf32, #tpu.memory_space<vmem>>, vector<1x8x256xf32>
    %1 = vector.shape_cast %0 : vector<1x8x256xf32> to vector<8x256xf32>
    %c0_2 = arith.constant 0 : index
    %c0_3 = arith.constant 0 : index
    %2 = vector.load %arg2[%c0_2, %c0_3] : memref<9x256xi32, #tpu.memory_space<vmem>>, vector<9x256xi32>
    %3 = vector.extract_strided_slice %2 {offsets = [0, 0], sizes = [1, 256], strides = [1, 1]} : vector<9x256xi32> to vector<1x256xi32>
    %c1_i32 = arith.constant 1 : i32
    %4 = tpu.dynamic_rotate %3 by %c1_i32 dim 1 : vector<1x256xi32>, i32 -> vector<1x256xi32>
    %c15_i32 = arith.constant 15 : i32
    %5 = tpu.dynamic_rotate %3 by %c15_i32 dim 1 : vector<1x256xi32>, i32 -> vector<1x256xi32>
    %c16_i32 = arith.constant 16 : i32
    %6 = tpu.dynamic_rotate %3 by %c16_i32 dim 1 : vector<1x256xi32>, i32 -> vector<1x256xi32>
    %c17_i32 = arith.constant 17 : i32
    %7 = tpu.dynamic_rotate %3 by %c17_i32 dim 1 : vector<1x256xi32>, i32 -> vector<1x256xi32>
    %c239_i32 = arith.constant 239 : i32
    %8 = tpu.dynamic_rotate %3 by %c239_i32 dim 1 : vector<1x256xi32>, i32 -> vector<1x256xi32>
    %c240_i32 = arith.constant 240 : i32
    %9 = tpu.dynamic_rotate %3 by %c240_i32 dim 1 : vector<1x256xi32>, i32 -> vector<1x256xi32>
    %c241_i32 = arith.constant 241 : i32
    %10 = tpu.dynamic_rotate %3 by %c241_i32 dim 1 : vector<1x256xi32>, i32 -> vector<1x256xi32>
    %c255_i32 = arith.constant 255 : i32
    %11 = tpu.dynamic_rotate %3 by %c255_i32 dim 1 : vector<1x256xi32>, i32 -> vector<1x256xi32>
    %12 = vector.extract_strided_slice %2 {offsets = [1, 0], sizes = [1, 256], strides = [1, 1]} : vector<9x256xi32> to vector<1x256xi32>
    %13 = arith.cmpi eq, %8, %12 : vector<1x256xi32>
    %14 = arith.cmpi eq, %7, %12 : vector<1x256xi32>
    %15 = vector.extract_strided_slice %2 {offsets = [2, 0], sizes = [1, 256], strides = [1, 1]} : vector<9x256xi32> to vector<1x256xi32>
    %16 = arith.cmpi eq, %9, %15 : vector<1x256xi32>
    %17 = arith.cmpi eq, %6, %15 : vector<1x256xi32>
    %18 = vector.extract_strided_slice %2 {offsets = [3, 0], sizes = [1, 256], strides = [1, 1]} : vector<9x256xi32> to vector<1x256xi32>
    %19 = arith.cmpi eq, %10, %18 : vector<1x256xi32>
    %20 = arith.cmpi eq, %5, %18 : vector<1x256xi32>
    %21 = vector.extract_strided_slice %2 {offsets = [4, 0], sizes = [1, 256], strides = [1, 1]} : vector<9x256xi32> to vector<1x256xi32>
    %22 = arith.cmpi eq, %11, %21 : vector<1x256xi32>
    %23 = arith.cmpi eq, %4, %21 : vector<1x256xi32>
    %24 = vector.extract_strided_slice %2 {offsets = [5, 0], sizes = [1, 256], strides = [1, 1]} : vector<9x256xi32> to vector<1x256xi32>
    %25 = arith.cmpi eq, %4, %24 : vector<1x256xi32>
    %26 = arith.cmpi eq, %11, %24 : vector<1x256xi32>
    %27 = vector.extract_strided_slice %2 {offsets = [6, 0], sizes = [1, 256], strides = [1, 1]} : vector<9x256xi32> to vector<1x256xi32>
    %28 = arith.cmpi eq, %5, %27 : vector<1x256xi32>
    %29 = arith.cmpi eq, %10, %27 : vector<1x256xi32>
    %30 = vector.extract_strided_slice %2 {offsets = [7, 0], sizes = [1, 256], strides = [1, 1]} : vector<9x256xi32> to vector<1x256xi32>
    %31 = arith.cmpi eq, %6, %30 : vector<1x256xi32>
    %32 = arith.cmpi eq, %9, %30 : vector<1x256xi32>
    %33 = vector.extract_strided_slice %2 {offsets = [8, 0], sizes = [1, 256], strides = [1, 1]} : vector<9x256xi32> to vector<1x256xi32>
    %34 = arith.cmpi eq, %7, %33 : vector<1x256xi32>
    %35 = arith.cmpi eq, %8, %33 : vector<1x256xi32>
    %c0_4 = arith.constant 0 : index
    %c0_5 = arith.constant 0 : index
    %36 = vector.load %arg9[%c0_4, %c0_5] : memref<16x8xf32, #tpu.memory_space<vmem>>, vector<16x8xf32>
    %cst = arith.constant dense<0.000000e+00> : vector<16x256xf32>
    %37 = tpu.matmul %36, %1, %cst {dimension_numbers = #tpu.dot_dimension_numbers<[1], [0], [0], [1], [0, 0, 1, 1], [], []>} : vector<16x8xf32>, vector<8x256xf32>, vector<16x256xf32> -> vector<16x256xf32>
    %c1_i32_6 = arith.constant 1 : i32
    %38 = tpu.dynamic_rotate %1 by %c1_i32_6 dim 1 : vector<8x256xf32>, i32 -> vector<8x256xf32>
    %c15_i32_7 = arith.constant 15 : i32
    %39 = tpu.dynamic_rotate %1 by %c15_i32_7 dim 1 : vector<8x256xf32>, i32 -> vector<8x256xf32>
    %c16_i32_8 = arith.constant 16 : i32
    %40 = tpu.dynamic_rotate %1 by %c16_i32_8 dim 1 : vector<8x256xf32>, i32 -> vector<8x256xf32>
    %c17_i32_9 = arith.constant 17 : i32
    %41 = tpu.dynamic_rotate %1 by %c17_i32_9 dim 1 : vector<8x256xf32>, i32 -> vector<8x256xf32>
    %c239_i32_10 = arith.constant 239 : i32
    %42 = tpu.dynamic_rotate %1 by %c239_i32_10 dim 1 : vector<8x256xf32>, i32 -> vector<8x256xf32>
    %c240_i32_11 = arith.constant 240 : i32
    %43 = tpu.dynamic_rotate %1 by %c240_i32_11 dim 1 : vector<8x256xf32>, i32 -> vector<8x256xf32>
    %c241_i32_12 = arith.constant 241 : i32
    %44 = tpu.dynamic_rotate %1 by %c241_i32_12 dim 1 : vector<8x256xf32>, i32 -> vector<8x256xf32>
    %c255_i32_13 = arith.constant 255 : i32
    %45 = tpu.dynamic_rotate %1 by %c255_i32_13 dim 1 : vector<8x256xf32>, i32 -> vector<8x256xf32>
    %cst_14 = arith.constant 0.000000e+00 : f32
    %46 = vector.shape_cast %14 : vector<1x256xi1> to vector<1x256xi1>
    %47 = vector.broadcast %46 : vector<1x256xi1> to vector<8x256xi1>
    %48 = vector.broadcast %cst_14 : f32 to vector<8x256xf32>
    %49 = arith.select %47, %41, %48 : vector<8x256xi1>, vector<8x256xf32>
    %50 = vector.shape_cast %13 : vector<1x256xi1> to vector<1x256xi1>
    %51 = vector.broadcast %50 : vector<1x256xi1> to vector<8x256xi1>
    %52 = arith.select %51, %42, %49 : vector<8x256xi1>, vector<8x256xf32>
    %cst_15 = arith.constant 0.000000e+00 : f32
    %53 = vector.shape_cast %17 : vector<1x256xi1> to vector<1x256xi1>
    %54 = vector.broadcast %53 : vector<1x256xi1> to vector<8x256xi1>
    %55 = vector.broadcast %cst_15 : f32 to vector<8x256xf32>
    %56 = arith.select %54, %40, %55 : vector<8x256xi1>, vector<8x256xf32>
    %57 = vector.shape_cast %16 : vector<1x256xi1> to vector<1x256xi1>
    %58 = vector.broadcast %57 : vector<1x256xi1> to vector<8x256xi1>
    %59 = arith.select %58, %43, %56 : vector<8x256xi1>, vector<8x256xf32>
    %cst_16 = arith.constant 0.000000e+00 : f32
    %60 = vector.shape_cast %20 : vector<1x256xi1> to vector<1x256xi1>
    %61 = vector.broadcast %60 : vector<1x256xi1> to vector<8x256xi1>
    %62 = vector.broadcast %cst_16 : f32 to vector<8x256xf32>
    %63 = arith.select %61, %39, %62 : vector<8x256xi1>, vector<8x256xf32>
    %64 = vector.shape_cast %19 : vector<1x256xi1> to vector<1x256xi1>
    %65 = vector.broadcast %64 : vector<1x256xi1> to vector<8x256xi1>
    %66 = arith.select %65, %44, %63 : vector<8x256xi1>, vector<8x256xf32>
    %cst_17 = arith.constant 0.000000e+00 : f32
    %67 = vector.shape_cast %23 : vector<1x256xi1> to vector<1x256xi1>
    %68 = vector.broadcast %67 : vector<1x256xi1> to vector<8x256xi1>
    %69 = vector.broadcast %cst_17 : f32 to vector<8x256xf32>
    %70 = arith.select %68, %38, %69 : vector<8x256xi1>, vector<8x256xf32>
    %71 = vector.shape_cast %22 : vector<1x256xi1> to vector<1x256xi1>
    %72 = vector.broadcast %71 : vector<1x256xi1> to vector<8x256xi1>
    %73 = arith.select %72, %45, %70 : vector<8x256xi1>, vector<8x256xf32>
    %cst_18 = arith.constant 0.000000e+00 : f32
    %74 = vector.shape_cast %26 : vector<1x256xi1> to vector<1x256xi1>
    %75 = vector.broadcast %74 : vector<1x256xi1> to vector<8x256xi1>
    %76 = vector.broadcast %cst_18 : f32 to vector<8x256xf32>
    %77 = arith.select %75, %45, %76 : vector<8x256xi1>, vector<8x256xf32>
    %78 = vector.shape_cast %25 : vector<1x256xi1> to vector<1x256xi1>
    %79 = vector.broadcast %78 : vector<1x256xi1> to vector<8x256xi1>
    %80 = arith.select %79, %38, %77 : vector<8x256xi1>, vector<8x256xf32>
    %cst_19 = arith.constant 0.000000e+00 : f32
    %81 = vector.shape_cast %29 : vector<1x256xi1> to vector<1x256xi1>
    %82 = vector.broadcast %81 : vector<1x256xi1> to vector<8x256xi1>
    %83 = vector.broadcast %cst_19 : f32 to vector<8x256xf32>
    %84 = arith.select %82, %44, %83 : vector<8x256xi1>, vector<8x256xf32>
    %85 = vector.shape_cast %28 : vector<1x256xi1> to vector<1x256xi1>
    %86 = vector.broadcast %85 : vector<1x256xi1> to vector<8x256xi1>
    %87 = arith.select %86, %39, %84 : vector<8x256xi1>, vector<8x256xf32>
    %cst_20 = arith.constant 0.000000e+00 : f32
    %88 = vector.shape_cast %32 : vector<1x256xi1> to vector<1x256xi1>
    %89 = vector.broadcast %88 : vector<1x256xi1> to vector<8x256xi1>
    %90 = vector.broadcast %cst_20 : f32 to vector<8x256xf32>
    %91 = arith.select %89, %43, %90 : vector<8x256xi1>, vector<8x256xf32>
    %92 = vector.shape_cast %31 : vector<1x256xi1> to vector<1x256xi1>
    %93 = vector.broadcast %92 : vector<1x256xi1> to vector<8x256xi1>
    %94 = arith.select %93, %40, %91 : vector<8x256xi1>, vector<8x256xf32>
    %cst_21 = arith.constant 0.000000e+00 : f32
    %95 = vector.shape_cast %35 : vector<1x256xi1> to vector<1x256xi1>
    %96 = vector.broadcast %95 : vector<1x256xi1> to vector<8x256xi1>
    %97 = vector.broadcast %cst_21 : f32 to vector<8x256xf32>
    %98 = arith.select %96, %42, %97 : vector<8x256xi1>, vector<8x256xf32>
    %99 = vector.shape_cast %34 : vector<1x256xi1> to vector<1x256xi1>
    %100 = vector.broadcast %99 : vector<1x256xi1> to vector<8x256xi1>
    %101 = arith.select %100, %41, %98 : vector<8x256xi1>, vector<8x256xf32>
    %102 = tpu.concatenate %52, %59, %66, %73, %1, %80, %87, %94, %101 in 0 : vector<8x256xf32>, vector<8x256xf32>, vector<8x256xf32>, vector<8x256xf32>, vector<8x256xf32>, vector<8x256xf32>, vector<8x256xf32>, vector<8x256xf32>, vector<8x256xf32> -> vector<72x256xf32>
    %c0_22 = arith.constant 0 : index
    %c0_23 = arith.constant 0 : index
    %103 = vector.load %arg3[%c0_22, %c0_23] : memref<8x72xf32, #tpu.memory_space<vmem>>, vector<8x72xf32>
    %cst_24 = arith.constant dense<0.000000e+00> : vector<8x256xf32>
    %104 = tpu.matmul %103, %102, %cst_24 {dimension_numbers = #tpu.dot_dimension_numbers<[1], [0], [0], [1], [0, 0, 1, 1], [], []>} : vector<8x72xf32>, vector<72x256xf32>, vector<8x256xf32> -> vector<8x256xf32>
    %c0_25 = arith.constant 0 : index
    %c0_26 = arith.constant 0 : index
    %105 = vector.load %arg6[%c0_25, %c0_26] : memref<8x1xf32, #tpu.memory_space<vmem>>, vector<8x1xf32>
    %106 = vector.broadcast %105 : vector<8x1xf32> to vector<8x256xf32>
    %107 = arith.addf %104, %106 : vector<8x256xf32>
    %cst_27 = arith.constant 0.000000e+00 : f32
    %108 = vector.broadcast %cst_27 : f32 to vector<8x256xf32>
    %109 = arith.maximumf %107, %108 : vector<8x256xf32>
    %c0_28 = arith.constant 0 : index
    %c0_29 = arith.constant 0 : index
    %110 = vector.load %arg10[%c0_28, %c0_29] : memref<16x8xf32, #tpu.memory_space<vmem>>, vector<16x8xf32>
    %cst_30 = arith.constant dense<0.000000e+00> : vector<16x256xf32>
    %111 = tpu.matmul %110, %109, %cst_30 {dimension_numbers = #tpu.dot_dimension_numbers<[1], [0], [0], [1], [0, 0, 1, 1], [], []>} : vector<16x8xf32>, vector<8x256xf32>, vector<16x256xf32> -> vector<16x256xf32>
    %112 = arith.addf %37, %111 : vector<16x256xf32>
    %c1_i32_31 = arith.constant 1 : i32
    %113 = tpu.dynamic_rotate %109 by %c1_i32_31 dim 1 : vector<8x256xf32>, i32 -> vector<8x256xf32>
    %c15_i32_32 = arith.constant 15 : i32
    %114 = tpu.dynamic_rotate %109 by %c15_i32_32 dim 1 : vector<8x256xf32>, i32 -> vector<8x256xf32>
    %c16_i32_33 = arith.constant 16 : i32
    %115 = tpu.dynamic_rotate %109 by %c16_i32_33 dim 1 : vector<8x256xf32>, i32 -> vector<8x256xf32>
    %c17_i32_34 = arith.constant 17 : i32
    %116 = tpu.dynamic_rotate %109 by %c17_i32_34 dim 1 : vector<8x256xf32>, i32 -> vector<8x256xf32>
    %c239_i32_35 = arith.constant 239 : i32
    %117 = tpu.dynamic_rotate %109 by %c239_i32_35 dim 1 : vector<8x256xf32>, i32 -> vector<8x256xf32>
    %c240_i32_36 = arith.constant 240 : i32
    %118 = tpu.dynamic_rotate %109 by %c240_i32_36 dim 1 : vector<8x256xf32>, i32 -> vector<8x256xf32>
    %c241_i32_37 = arith.constant 241 : i32
    %119 = tpu.dynamic_rotate %109 by %c241_i32_37 dim 1 : vector<8x256xf32>, i32 -> vector<8x256xf32>
    %c255_i32_38 = arith.constant 255 : i32
    %120 = tpu.dynamic_rotate %109 by %c255_i32_38 dim 1 : vector<8x256xf32>, i32 -> vector<8x256xf32>
    %cst_39 = arith.constant 0.000000e+00 : f32
    %121 = vector.shape_cast %14 : vector<1x256xi1> to vector<1x256xi1>
    %122 = vector.broadcast %121 : vector<1x256xi1> to vector<8x256xi1>
    %123 = vector.broadcast %cst_39 : f32 to vector<8x256xf32>
    %124 = arith.select %122, %116, %123 : vector<8x256xi1>, vector<8x256xf32>
    %125 = vector.shape_cast %13 : vector<1x256xi1> to vector<1x256xi1>
    %126 = vector.broadcast %125 : vector<1x256xi1> to vector<8x256xi1>
    %127 = arith.select %126, %117, %124 : vector<8x256xi1>, vector<8x256xf32>
    %cst_40 = arith.constant 0.000000e+00 : f32
    %128 = vector.shape_cast %17 : vector<1x256xi1> to vector<1x256xi1>
    %129 = vector.broadcast %128 : vector<1x256xi1> to vector<8x256xi1>
    %130 = vector.broadcast %cst_40 : f32 to vector<8x256xf32>
    %131 = arith.select %129, %115, %130 : vector<8x256xi1>, vector<8x256xf32>
    %132 = vector.shape_cast %16 : vector<1x256xi1> to vector<1x256xi1>
    %133 = vector.broadcast %132 : vector<1x256xi1> to vector<8x256xi1>
    %134 = arith.select %133, %118, %131 : vector<8x256xi1>, vector<8x256xf32>
    %cst_41 = arith.constant 0.000000e+00 : f32
    %135 = vector.shape_cast %20 : vector<1x256xi1> to vector<1x256xi1>
    %136 = vector.broadcast %135 : vector<1x256xi1> to vector<8x256xi1>
    %137 = vector.broadcast %cst_41 : f32 to vector<8x256xf32>
    %138 = arith.select %136, %114, %137 : vector<8x256xi1>, vector<8x256xf32>
    %139 = vector.shape_cast %19 : vector<1x256xi1> to vector<1x256xi1>
    %140 = vector.broadcast %139 : vector<1x256xi1> to vector<8x256xi1>
    %141 = arith.select %140, %119, %138 : vector<8x256xi1>, vector<8x256xf32>
    %cst_42 = arith.constant 0.000000e+00 : f32
    %142 = vector.shape_cast %23 : vector<1x256xi1> to vector<1x256xi1>
    %143 = vector.broadcast %142 : vector<1x256xi1> to vector<8x256xi1>
    %144 = vector.broadcast %cst_42 : f32 to vector<8x256xf32>
    %145 = arith.select %143, %113, %144 : vector<8x256xi1>, vector<8x256xf32>
    %146 = vector.shape_cast %22 : vector<1x256xi1> to vector<1x256xi1>
    %147 = vector.broadcast %146 : vector<1x256xi1> to vector<8x256xi1>
    %148 = arith.select %147, %120, %145 : vector<8x256xi1>, vector<8x256xf32>
    %cst_43 = arith.constant 0.000000e+00 : f32
    %149 = vector.shape_cast %26 : vector<1x256xi1> to vector<1x256xi1>
    %150 = vector.broadcast %149 : vector<1x256xi1> to vector<8x256xi1>
    %151 = vector.broadcast %cst_43 : f32 to vector<8x256xf32>
    %152 = arith.select %150, %120, %151 : vector<8x256xi1>, vector<8x256xf32>
    %153 = vector.shape_cast %25 : vector<1x256xi1> to vector<1x256xi1>
    %154 = vector.broadcast %153 : vector<1x256xi1> to vector<8x256xi1>
    %155 = arith.select %154, %113, %152 : vector<8x256xi1>, vector<8x256xf32>
    %cst_44 = arith.constant 0.000000e+00 : f32
    %156 = vector.shape_cast %29 : vector<1x256xi1> to vector<1x256xi1>
    %157 = vector.broadcast %156 : vector<1x256xi1> to vector<8x256xi1>
    %158 = vector.broadcast %cst_44 : f32 to vector<8x256xf32>
    %159 = arith.select %157, %119, %158 : vector<8x256xi1>, vector<8x256xf32>
    %160 = vector.shape_cast %28 : vector<1x256xi1> to vector<1x256xi1>
    %161 = vector.broadcast %160 : vector<1x256xi1> to vector<8x256xi1>
    %162 = arith.select %161, %114, %159 : vector<8x256xi1>, vector<8x256xf32>
    %cst_45 = arith.constant 0.000000e+00 : f32
    %163 = vector.shape_cast %32 : vector<1x256xi1> to vector<1x256xi1>
    %164 = vector.broadcast %163 : vector<1x256xi1> to vector<8x256xi1>
    %165 = vector.broadcast %cst_45 : f32 to vector<8x256xf32>
    %166 = arith.select %164, %118, %165 : vector<8x256xi1>, vector<8x256xf32>
    %167 = vector.shape_cast %31 : vector<1x256xi1> to vector<1x256xi1>
    %168 = vector.broadcast %167 : vector<1x256xi1> to vector<8x256xi1>
    %169 = arith.select %168, %115, %166 : vector<8x256xi1>, vector<8x256xf32>
    %cst_46 = arith.constant 0.000000e+00 : f32
    %170 = vector.shape_cast %35 : vector<1x256xi1> to vector<1x256xi1>
    %171 = vector.broadcast %170 : vector<1x256xi1> to vector<8x256xi1>
    %172 = vector.broadcast %cst_46 : f32 to vector<8x256xf32>
    %173 = arith.select %171, %117, %172 : vector<8x256xi1>, vector<8x256xf32>
    %174 = vector.shape_cast %34 : vector<1x256xi1> to vector<1x256xi1>
    %175 = vector.broadcast %174 : vector<1x256xi1> to vector<8x256xi1>
    %176 = arith.select %175, %116, %173 : vector<8x256xi1>, vector<8x256xf32>
    %177 = tpu.concatenate %127, %134, %141, %148, %109, %155, %162, %169, %176 in 0 : vector<8x256xf32>, vector<8x256xf32>, vector<8x256xf32>, vector<8x256xf32>, vector<8x256xf32>, vector<8x256xf32>, vector<8x256xf32>, vector<8x256xf32>, vector<8x256xf32> -> vector<72x256xf32>
    %c0_47 = arith.constant 0 : index
    %c0_48 = arith.constant 0 : index
    %178 = vector.load %arg4[%c0_47, %c0_48] : memref<8x72xf32, #tpu.memory_space<vmem>>, vector<8x72xf32>
    %cst_49 = arith.constant dense<0.000000e+00> : vector<8x256xf32>
    %179 = tpu.matmul %178, %177, %cst_49 {dimension_numbers = #tpu.dot_dimension_numbers<[1], [0], [0], [1], [0, 0, 1, 1], [], []>} : vector<8x72xf32>, vector<72x256xf32>, vector<8x256xf32> -> vector<8x256xf32>
    %c0_50 = arith.constant 0 : index
    %c0_51 = arith.constant 0 : index
    %180 = vector.load %arg7[%c0_50, %c0_51] : memref<8x1xf32, #tpu.memory_space<vmem>>, vector<8x1xf32>
    %181 = vector.broadcast %180 : vector<8x1xf32> to vector<8x256xf32>
    %182 = arith.addf %179, %181 : vector<8x256xf32>
    %cst_52 = arith.constant 0.000000e+00 : f32
    %183 = vector.broadcast %cst_52 : f32 to vector<8x256xf32>
    %184 = arith.maximumf %182, %183 : vector<8x256xf32>
    %c0_53 = arith.constant 0 : index
    %c0_54 = arith.constant 0 : index
    %185 = vector.load %arg11[%c0_53, %c0_54] : memref<16x8xf32, #tpu.memory_space<vmem>>, vector<16x8xf32>
    %cst_55 = arith.constant dense<0.000000e+00> : vector<16x256xf32>
    %186 = tpu.matmul %185, %184, %cst_55 {dimension_numbers = #tpu.dot_dimension_numbers<[1], [0], [0], [1], [0, 0, 1, 1], [], []>} : vector<16x8xf32>, vector<8x256xf32>, vector<16x256xf32> -> vector<16x256xf32>
    %187 = arith.addf %112, %186 : vector<16x256xf32>
    %c1_i32_56 = arith.constant 1 : i32
    %188 = tpu.dynamic_rotate %184 by %c1_i32_56 dim 1 : vector<8x256xf32>, i32 -> vector<8x256xf32>
    %c15_i32_57 = arith.constant 15 : i32
    %189 = tpu.dynamic_rotate %184 by %c15_i32_57 dim 1 : vector<8x256xf32>, i32 -> vector<8x256xf32>
    %c16_i32_58 = arith.constant 16 : i32
    %190 = tpu.dynamic_rotate %184 by %c16_i32_58 dim 1 : vector<8x256xf32>, i32 -> vector<8x256xf32>
    %c17_i32_59 = arith.constant 17 : i32
    %191 = tpu.dynamic_rotate %184 by %c17_i32_59 dim 1 : vector<8x256xf32>, i32 -> vector<8x256xf32>
    %c239_i32_60 = arith.constant 239 : i32
    %192 = tpu.dynamic_rotate %184 by %c239_i32_60 dim 1 : vector<8x256xf32>, i32 -> vector<8x256xf32>
    %c240_i32_61 = arith.constant 240 : i32
    %193 = tpu.dynamic_rotate %184 by %c240_i32_61 dim 1 : vector<8x256xf32>, i32 -> vector<8x256xf32>
    %c241_i32_62 = arith.constant 241 : i32
    %194 = tpu.dynamic_rotate %184 by %c241_i32_62 dim 1 : vector<8x256xf32>, i32 -> vector<8x256xf32>
    %c255_i32_63 = arith.constant 255 : i32
    %195 = tpu.dynamic_rotate %184 by %c255_i32_63 dim 1 : vector<8x256xf32>, i32 -> vector<8x256xf32>
    %cst_64 = arith.constant 0.000000e+00 : f32
    %196 = vector.shape_cast %14 : vector<1x256xi1> to vector<1x256xi1>
    %197 = vector.broadcast %196 : vector<1x256xi1> to vector<8x256xi1>
    %198 = vector.broadcast %cst_64 : f32 to vector<8x256xf32>
    %199 = arith.select %197, %191, %198 : vector<8x256xi1>, vector<8x256xf32>
    %200 = vector.shape_cast %13 : vector<1x256xi1> to vector<1x256xi1>
    %201 = vector.broadcast %200 : vector<1x256xi1> to vector<8x256xi1>
    %202 = arith.select %201, %192, %199 : vector<8x256xi1>, vector<8x256xf32>
    %cst_65 = arith.constant 0.000000e+00 : f32
    %203 = vector.shape_cast %17 : vector<1x256xi1> to vector<1x256xi1>
    %204 = vector.broadcast %203 : vector<1x256xi1> to vector<8x256xi1>
    %205 = vector.broadcast %cst_65 : f32 to vector<8x256xf32>
    %206 = arith.select %204, %190, %205 : vector<8x256xi1>, vector<8x256xf32>
    %207 = vector.shape_cast %16 : vector<1x256xi1> to vector<1x256xi1>
    %208 = vector.broadcast %207 : vector<1x256xi1> to vector<8x256xi1>
    %209 = arith.select %208, %193, %206 : vector<8x256xi1>, vector<8x256xf32>
    %cst_66 = arith.constant 0.000000e+00 : f32
    %210 = vector.shape_cast %20 : vector<1x256xi1> to vector<1x256xi1>
    %211 = vector.broadcast %210 : vector<1x256xi1> to vector<8x256xi1>
    %212 = vector.broadcast %cst_66 : f32 to vector<8x256xf32>
    %213 = arith.select %211, %189, %212 : vector<8x256xi1>, vector<8x256xf32>
    %214 = vector.shape_cast %19 : vector<1x256xi1> to vector<1x256xi1>
    %215 = vector.broadcast %214 : vector<1x256xi1> to vector<8x256xi1>
    %216 = arith.select %215, %194, %213 : vector<8x256xi1>, vector<8x256xf32>
    %cst_67 = arith.constant 0.000000e+00 : f32
    %217 = vector.shape_cast %23 : vector<1x256xi1> to vector<1x256xi1>
    %218 = vector.broadcast %217 : vector<1x256xi1> to vector<8x256xi1>
    %219 = vector.broadcast %cst_67 : f32 to vector<8x256xf32>
    %220 = arith.select %218, %188, %219 : vector<8x256xi1>, vector<8x256xf32>
    %221 = vector.shape_cast %22 : vector<1x256xi1> to vector<1x256xi1>
    %222 = vector.broadcast %221 : vector<1x256xi1> to vector<8x256xi1>
    %223 = arith.select %222, %195, %220 : vector<8x256xi1>, vector<8x256xf32>
    %cst_68 = arith.constant 0.000000e+00 : f32
    %224 = vector.shape_cast %26 : vector<1x256xi1> to vector<1x256xi1>
    %225 = vector.broadcast %224 : vector<1x256xi1> to vector<8x256xi1>
    %226 = vector.broadcast %cst_68 : f32 to vector<8x256xf32>
    %227 = arith.select %225, %195, %226 : vector<8x256xi1>, vector<8x256xf32>
    %228 = vector.shape_cast %25 : vector<1x256xi1> to vector<1x256xi1>
    %229 = vector.broadcast %228 : vector<1x256xi1> to vector<8x256xi1>
    %230 = arith.select %229, %188, %227 : vector<8x256xi1>, vector<8x256xf32>
    %cst_69 = arith.constant 0.000000e+00 : f32
    %231 = vector.shape_cast %29 : vector<1x256xi1> to vector<1x256xi1>
    %232 = vector.broadcast %231 : vector<1x256xi1> to vector<8x256xi1>
    %233 = vector.broadcast %cst_69 : f32 to vector<8x256xf32>
    %234 = arith.select %232, %194, %233 : vector<8x256xi1>, vector<8x256xf32>
    %235 = vector.shape_cast %28 : vector<1x256xi1> to vector<1x256xi1>
    %236 = vector.broadcast %235 : vector<1x256xi1> to vector<8x256xi1>
    %237 = arith.select %236, %189, %234 : vector<8x256xi1>, vector<8x256xf32>
    %cst_70 = arith.constant 0.000000e+00 : f32
    %238 = vector.shape_cast %32 : vector<1x256xi1> to vector<1x256xi1>
    %239 = vector.broadcast %238 : vector<1x256xi1> to vector<8x256xi1>
    %240 = vector.broadcast %cst_70 : f32 to vector<8x256xf32>
    %241 = arith.select %239, %193, %240 : vector<8x256xi1>, vector<8x256xf32>
    %242 = vector.shape_cast %31 : vector<1x256xi1> to vector<1x256xi1>
    %243 = vector.broadcast %242 : vector<1x256xi1> to vector<8x256xi1>
    %244 = arith.select %243, %190, %241 : vector<8x256xi1>, vector<8x256xf32>
    %cst_71 = arith.constant 0.000000e+00 : f32
    %245 = vector.shape_cast %35 : vector<1x256xi1> to vector<1x256xi1>
    %246 = vector.broadcast %245 : vector<1x256xi1> to vector<8x256xi1>
    %247 = vector.broadcast %cst_71 : f32 to vector<8x256xf32>
    %248 = arith.select %246, %192, %247 : vector<8x256xi1>, vector<8x256xf32>
    %249 = vector.shape_cast %34 : vector<1x256xi1> to vector<1x256xi1>
    %250 = vector.broadcast %249 : vector<1x256xi1> to vector<8x256xi1>
    %251 = arith.select %250, %191, %248 : vector<8x256xi1>, vector<8x256xf32>
    %252 = tpu.concatenate %202, %209, %216, %223, %184, %230, %237, %244, %251 in 0 : vector<8x256xf32>, vector<8x256xf32>, vector<8x256xf32>, vector<8x256xf32>, vector<8x256xf32>, vector<8x256xf32>, vector<8x256xf32>, vector<8x256xf32>, vector<8x256xf32> -> vector<72x256xf32>
    %c0_72 = arith.constant 0 : index
    %c0_73 = arith.constant 0 : index
    %253 = vector.load %arg5[%c0_72, %c0_73] : memref<8x72xf32, #tpu.memory_space<vmem>>, vector<8x72xf32>
    %cst_74 = arith.constant dense<0.000000e+00> : vector<8x256xf32>
    %254 = tpu.matmul %253, %252, %cst_74 {dimension_numbers = #tpu.dot_dimension_numbers<[1], [0], [0], [1], [0, 0, 1, 1], [], []>} : vector<8x72xf32>, vector<72x256xf32>, vector<8x256xf32> -> vector<8x256xf32>
    %c0_75 = arith.constant 0 : index
    %c0_76 = arith.constant 0 : index
    %255 = vector.load %arg8[%c0_75, %c0_76] : memref<8x1xf32, #tpu.memory_space<vmem>>, vector<8x1xf32>
    %256 = vector.broadcast %255 : vector<8x1xf32> to vector<8x256xf32>
    %257 = arith.addf %254, %256 : vector<8x256xf32>
    %cst_77 = arith.constant 0.000000e+00 : f32
    %258 = vector.broadcast %cst_77 : f32 to vector<8x256xf32>
    %259 = arith.maximumf %257, %258 : vector<8x256xf32>
    %c0_78 = arith.constant 0 : index
    %c0_79 = arith.constant 0 : index
    %260 = vector.load %arg12[%c0_78, %c0_79] : memref<16x8xf32, #tpu.memory_space<vmem>>, vector<16x8xf32>
    %cst_80 = arith.constant dense<0.000000e+00> : vector<16x256xf32>
    %261 = tpu.matmul %260, %259, %cst_80 {dimension_numbers = #tpu.dot_dimension_numbers<[1], [0], [0], [1], [0, 0, 1, 1], [], []>} : vector<16x8xf32>, vector<8x256xf32>, vector<16x256xf32> -> vector<16x256xf32>
    %262 = arith.addf %187, %261 : vector<16x256xf32>
    %c0_81 = arith.constant 0 : index
    %c0_82 = arith.constant 0 : index
    %263 = vector.load %arg13[%c0_81, %c0_82] : memref<16x1xf32, #tpu.memory_space<vmem>>, vector<16x1xf32>
    %264 = vector.broadcast %263 : vector<16x1xf32> to vector<16x256xf32>
    %265 = arith.addf %262, %264 : vector<16x256xf32>
    %cst_83 = arith.constant 0.000000e+00 : f32
    %266 = vector.broadcast %cst_83 : f32 to vector<16x256xf32>
    %267 = arith.maximumf %265, %266 : vector<16x256xf32>
    %c0_84 = arith.constant 0 : index
    %c0_85 = arith.constant 0 : index
    %c0_86 = arith.constant 0 : index
    %268 = vector.load %arg14[%c0_84, %c0_85, %c0_86] : memref<1x16x256xf32, #tpu.memory_space<vmem>>, vector<1x16x256xf32>
    %269 = vector.shape_cast %268 : vector<1x16x256xf32> to vector<16x256xf32>
    %270 = vector.shape_cast %267 : vector<16x256xf32> to vector<1x16x256xf32>
    tpu.vector_store %arg14[%c0_84, %c0_85, %c0_86], %270 {strides = array<i32>} : memref<1x16x256xf32, #tpu.memory_space<vmem>>, vector<1x16x256xf32>,
    return
  }
  func.func @transform_0(%arg0: i32) -> (i32, i32, i32) {
    %c0_i32 = arith.constant 0 : i32
    %c0_i32_0 = arith.constant 0 : i32
    %c0_i32_1 = arith.constant 0 : i32
    return %arg0, %c0_i32, %c0_i32_0 : i32, i32, i32
  }
  func.func @transform_1(%arg0: i32) -> (i32, i32) {
    %c0_i32 = arith.constant 0 : i32
    %c0_i32_0 = arith.constant 0 : i32
    %c0_i32_1 = arith.constant 0 : i32
    return %c0_i32, %c0_i32_0 : i32, i32
  }
  func.func @transform_2(%arg0: i32) -> (i32, i32) {
    %c0_i32 = arith.constant 0 : i32
    %c0_i32_0 = arith.constant 0 : i32
    %c0_i32_1 = arith.constant 0 : i32
    return %c0_i32, %c0_i32_0 : i32, i32
  }
  func.func @transform_3(%arg0: i32) -> (i32, i32) {
    %c0_i32 = arith.constant 0 : i32
    %c0_i32_0 = arith.constant 0 : i32
    %c0_i32_1 = arith.constant 0 : i32
    return %c0_i32, %c0_i32_0 : i32, i32
  }
  func.func @transform_4(%arg0: i32) -> (i32, i32) {
    %c0_i32 = arith.constant 0 : i32
    %c0_i32_0 = arith.constant 0 : i32
    %c0_i32_1 = arith.constant 0 : i32
    return %c0_i32, %c0_i32_0 : i32, i32
  }
  func.func @transform_5(%arg0: i32) -> (i32, i32) {
    %c0_i32 = arith.constant 0 : i32
    %c0_i32_0 = arith.constant 0 : i32
    %c0_i32_1 = arith.constant 0 : i32
    return %c0_i32, %c0_i32_0 : i32, i32
  }
  func.func @transform_6(%arg0: i32) -> (i32, i32) {
    %c0_i32 = arith.constant 0 : i32
    %c0_i32_0 = arith.constant 0 : i32
    %c0_i32_1 = arith.constant 0 : i32
    return %c0_i32, %c0_i32_0 : i32, i32
  }
  func.func @transform_7(%arg0: i32) -> (i32, i32) {
    %c0_i32 = arith.constant 0 : i32
    %c0_i32_0 = arith.constant 0 : i32
    %c0_i32_1 = arith.constant 0 : i32
    return %c0_i32, %c0_i32_0 : i32, i32
  }
  func.func @transform_8(%arg0: i32) -> (i32, i32) {
    %c0_i32 = arith.constant 0 : i32
    %c0_i32_0 = arith.constant 0 : i32
    %c0_i32_1 = arith.constant 0 : i32
    return %c0_i32, %c0_i32_0 : i32, i32
  }
  func.func @transform_9(%arg0: i32) -> (i32, i32) {
    %c0_i32 = arith.constant 0 : i32
    %c0_i32_0 = arith.constant 0 : i32
    %c0_i32_1 = arith.constant 0 : i32
    return %c0_i32, %c0_i32_0 : i32, i32
  }
  func.func @transform_10(%arg0: i32) -> (i32, i32) {
    %c0_i32 = arith.constant 0 : i32
    %c0_i32_0 = arith.constant 0 : i32
    %c0_i32_1 = arith.constant 0 : i32
    return %c0_i32, %c0_i32_0 : i32, i32
  }
  func.func @transform_11(%arg0: i32) -> (i32, i32) {
    %c0_i32 = arith.constant 0 : i32
    %c0_i32_0 = arith.constant 0 : i32
    %c0_i32_1 = arith.constant 0 : i32
    return %c0_i32, %c0_i32_0 : i32, i32
  }
  func.func @transform_12(%arg0: i32) -> (i32, i32) {
    %c0_i32 = arith.constant 0 : i32
    %c0_i32_0 = arith.constant 0 : i32
    %c0_i32_1 = arith.constant 0 : i32
    return %c0_i32, %c0_i32_0 : i32, i32
  }
  func.func @transform_13(%arg0: i32) -> (i32, i32, i32) {
    %c0_i32 = arith.constant 0 : i32
    %c0_i32_0 = arith.constant 0 : i32
    %c0_i32_1 = arith.constant 0 : i32
    return %arg0, %c0_i32, %c0_i32_0 : i32, i32, i32
  }
}

</mosaic_0001>

<llo_original>
// kernel: tpu_custom_call.1
$region0: #{tpu_custom_call.1}
  #allocation0 [shape = 'u32[]', space=smem, size = 0x4, offset = 0x4, fixed_abs, tag = 'smem constant byte address 0x4 - core index']
  #allocation1 [shape = 'u32[144,128]{1,0:T(1,128)}', space=vmem, size = 0x12000, scoped, tag = 'internal scratch']
  %s0 = inlined_call_operand.vmem [shape: f32[2,8,256], index: 0, kind: input, shape index: {}]
  %s1 = inlined_call_operand.vmem [shape: s32[9,256], index: 1, kind: input, shape index: {}]
  %s2 = inlined_call_operand.vmem [shape: f32[8,72], index: 2, kind: input, shape index: {}]
  %s3 = inlined_call_operand.vmem [shape: f32[8,72], index: 3, kind: input, shape index: {}]
  %s4 = inlined_call_operand.vmem [shape: f32[8,72], index: 4, kind: input, shape index: {}]
  %s5 = inlined_call_operand.vmem [shape: f32[8,1], index: 5, kind: input, shape index: {}]
  %s6 = inlined_call_operand.vmem [shape: f32[8,1], index: 6, kind: input, shape index: {}]
  %s7 = inlined_call_operand.vmem [shape: f32[8,1], index: 7, kind: input, shape index: {}]
  %s8 = inlined_call_operand.vmem [shape: f32[16,8], index: 8, kind: input, shape index: {}]
  %s9 = inlined_call_operand.vmem [shape: f32[16,8], index: 9, kind: input, shape index: {}]
  %s10 = inlined_call_operand.vmem [shape: f32[16,8], index: 10, kind: input, shape index: {}]
  %s11 = inlined_call_operand.vmem [shape: f32[16,8], index: 11, kind: input, shape index: {}]
  %s12 = inlined_call_operand.vmem [shape: f32[16,1], index: 12, kind: input, shape index: {}]
  %s13 = inlined_call_operand.hbm [shape: f32[2,16,256], index: 13, kind: output, shape index: {}]
  %s14 = sld [smem:[#allocation0]]
  $region85: #{tpu_custom_call.1} parent=0
    _
  %s16 = ssub.s32 1, %s14
  %s17 = scalar_select 0, %s16, %s14
  $region1: #{tpu_custom_call.1} parent=0
    #allocation2 [shape = 'u8[32768]{0}', space=vmem, size = 0x8000, scoped, tag = 'output window, operand 0']
    #allocation3 [shape = 's32[2]{0}', space=sflag, size = 0x8, scoped, tag = 'scoped memory for tpu_custom_call.1']
    %18 = vsyncpa [#allocation3], 0
    %s19 = scalar_lea.sflag [#allocation3], 1
    %20 = vsyncpa %s19, 0
    loop: start=0, step=1, limit=4
    $region2: #{tpu_custom_call.1} parent=1 // loop_pre_header
      _
    $region3: #{tpu_custom_call.1} parent=1 // loop_header
      %s22 = sphi 0, %s26
      %p23 = scmp.ge.s32.totalorder %s22, 4
      %s32 = sphi 0, %s34
      %s35 = sphi 0, %s32
      %s36 = sphi 0, %s35
      %s52 = sphi 0, %s36
      %s56 = sphi 0, %s56
      %s58 = sphi 0, %s56
      %s59 = sphi 0, %s58
      %s73 = sphi 0, %s59
      %s77 = sphi 0, %s77
      %s79 = sphi 0, %s77
      %s80 = sphi 0, %s79
      %s94 = sphi 0, %s80
      %s98 = sphi 0, %s98
      %s100 = sphi 0, %s98
      %s101 = sphi 0, %s100
      %s115 = sphi 0, %s101
      %s119 = sphi 0, %s119
      %s121 = sphi 0, %s119
      %s122 = sphi 0, %s121
      %s136 = sphi 0, %s122
      %s140 = sphi 0, %s140
      %s142 = sphi 0, %s140
      %s143 = sphi 0, %s142
      %s157 = sphi 0, %s143
      %s161 = sphi 0, %s161
      %s163 = sphi 0, %s161
      %s164 = sphi 0, %s163
      %s178 = sphi 0, %s164
      %s182 = sphi 0, %s182
      %s184 = sphi 0, %s182
      %s185 = sphi 0, %s184
      %s199 = sphi 0, %s185
      %s203 = sphi 0, %s203
      %s205 = sphi 0, %s203
      %s206 = sphi 0, %s205
      %s220 = sphi 0, %s206
      %s224 = sphi 0, %s224
      %s226 = sphi 0, %s224
      %s227 = sphi 0, %s226
      %s241 = sphi 0, %s227
      %s245 = sphi 0, %s245
      %s247 = sphi 0, %s245
      %s248 = sphi 0, %s247
      %s262 = sphi 0, %s248
      %s266 = sphi 0, %s266
      %s268 = sphi 0, %s266
      %s269 = sphi 0, %s268
      %s283 = sphi 0, %s269
      %s287 = sphi 0, %s287
      %s289 = sphi 0, %s287
      %s290 = sphi 0, %s289
      %s304 = sphi 0, %s290
      %s310 = sphi 0, %s312
      %s313 = sphi 0, %s310
      %s314 = sphi 0, %s313
      %s330 = sphi 0, %s314
    $region4: #{tpu_custom_call.1} parent=1 // loop_header_branch
      %25 = sbr.rel (%p23) target = $region8
    $region5: #{tpu_custom_call.1} parent=1 // loop_body
      %s27 = ssub.s32 %s22, 1
      %s28 = ssub.s32 %s22, 2
      %s29 = sadd.s32 %s22, 1
      %s30 = ssub.s32 %s22, %s29
      %p31 = scmp.eq.s32.totalorder %s30, 0
      %s33 = sadd.s32 %s32, 1
      %s34 = scalar_select %p31, %s32, %s33
      %p37 = pneg %p31
      %p38 = scmp.eq.s32.totalorder %s22, 1
      %p39 = por %p37, %p38
      %p40 = scmp.ne.s32.totalorder %s32, %s35
      %p41 = scmp.eq.s32.totalorder %s22, 0
      %p42 = por %p40, %p41
      %p43 = scmp.ne.s32.totalorder %s32, %s35
      %p44 = scmp.eq.s32.totalorder %s27, 1
      %p45 = por %p43, %p44
      %p46 = scmp.ne.s32.totalorder %s35, %s36
      %p47 = scmp.eq.s32.totalorder %s27, 0
      %p48 = por %p46, %p47
      %p49 = scmp.ne.s32.totalorder %s35, %s36
      %p50 = scmp.eq.s32.totalorder %s28, 1
      %p51 = por %p49, %p50
      %p53 = scmp.ne.s32.totalorder %s36, %s52
      %p54 = scmp.eq.s32.totalorder %s28, 0
      %p55 = por %p53, %p54
      %s57 = sadd.s32 %s56, 1
      %p60 = scmp.eq.s32.totalorder %s22, 1
      %p61 = scmp.ne.s32.totalorder %s56, %s58
      %p62 = scmp.eq.s32.totalorder %s22, 0
      %p63 = por %p61, %p62
      %p64 = scmp.ne.s32.totalorder %s56, %s58
      %p65 = scmp.eq.s32.totalorder %s27, 1
      %p66 = por %p64, %p65
      %p67 = scmp.ne.s32.totalorder %s58, %s59
      %p68 = scmp.eq.s32.totalorder %s27, 0
      %p69 = por %p67, %p68
      %p70 = scmp.ne.s32.totalorder %s58, %s59
      %p71 = scmp.eq.s32.totalorder %s28, 1
      %p72 = por %p70, %p71
      %p74 = scmp.ne.s32.totalorder %s59, %s73
      %p75 = scmp.eq.s32.totalorder %s28, 0
      %p76 = por %p74, %p75
      %s78 = sadd.s32 %s77, 1
      %p81 = scmp.eq.s32.totalorder %s22, 1
      %p82 = scmp.ne.s32.totalorder %s77, %s79
      %p83 = scmp.eq.s32.totalorder %s22, 0
      %p84 = por %p82, %p83
      %p85 = scmp.ne.s32.totalorder %s77, %s79
      %p86 = scmp.eq.s32.totalorder %s27, 1
      %p87 = por %p85, %p86
      %p88 = scmp.ne.s32.totalorder %s79, %s80
      %p89 = scmp.eq.s32.totalorder %s27, 0
      %p90 = por %p88, %p89
      %p91 = scmp.ne.s32.totalorder %s79, %s80
      %p92 = scmp.eq.s32.totalorder %s28, 1
      %p93 = por %p91, %p92
      %p95 = scmp.ne.s32.totalorder %s80, %s94
      %p96 = scmp.eq.s32.totalorder %s28, 0
      %p97 = por %p95, %p96
      %s99 = sadd.s32 %s98, 1
      %p102 = scmp.eq.s32.totalorder %s22, 1
      %p103 = scmp.ne.s32.totalorder %s98, %s100
      %p104 = scmp.eq.s32.totalorder %s22, 0
      %p105 = por %p103, %p104
      %p106 = scmp.ne.s32.totalorder %s98, %s100
      %p107 = scmp.eq.s32.totalorder %s27, 1
      %p108 = por %p106, %p107
      %p109 = scmp.ne.s32.totalorder %s100, %s101
      %p110 = scmp.eq.s32.totalorder %s27, 0
      %p111 = por %p109, %p110
      %p112 = scmp.ne.s32.totalorder %s100, %s101
      %p113 = scmp.eq.s32.totalorder %s28, 1
      %p114 = por %p112, %p113
      %p116 = scmp.ne.s32.totalorder %s101, %s115
      %p117 = scmp.eq.s32.totalorder %s28, 0
      %p118 = por %p116, %p117
      %s120 = sadd.s32 %s119, 1
      %p123 = scmp.eq.s32.totalorder %s22, 1
      %p124 = scmp.ne.s32.totalorder %s119, %s121
      %p125 = scmp.eq.s32.totalorder %s22, 0
      %p126 = por %p124, %p125
      %p127 = scmp.ne.s32.totalorder %s119, %s121
      %p128 = scmp.eq.s32.totalorder %s27, 1
      %p129 = por %p127, %p128
      %p130 = scmp.ne.s32.totalorder %s121, %s122
      %p131 = scmp.eq.s32.totalorder %s27, 0
      %p132 = por %p130, %p131
      %p133 = scmp.ne.s32.totalorder %s121, %s122
      %p134 = scmp.eq.s32.totalorder %s28, 1
      %p135 = por %p133, %p134
      %p137 = scmp.ne.s32.totalorder %s122, %s136
      %p138 = scmp.eq.s32.totalorder %s28, 0
      %p139 = por %p137, %p138
      %s141 = sadd.s32 %s140, 1
      %p144 = scmp.eq.s32.totalorder %s22, 1
      %p145 = scmp.ne.s32.totalorder %s140, %s142
      %p146 = scmp.eq.s32.totalorder %s22, 0
      %p147 = por %p145, %p146
      %p148 = scmp.ne.s32.totalorder %s140, %s142
      %p149 = scmp.eq.s32.totalorder %s27, 1
      %p150 = por %p148, %p149
      %p151 = scmp.ne.s32.totalorder %s142, %s143
      %p152 = scmp.eq.s32.totalorder %s27, 0
      %p153 = por %p151, %p152
      %p154 = scmp.ne.s32.totalorder %s142, %s143
      %p155 = scmp.eq.s32.totalorder %s28, 1
      %p156 = por %p154, %p155
      %p158 = scmp.ne.s32.totalorder %s143, %s157
      %p159 = scmp.eq.s32.totalorder %s28, 0
      %p160 = por %p158, %p159
      %s162 = sadd.s32 %s161, 1
      %p165 = scmp.eq.s32.totalorder %s22, 1
      %p166 = scmp.ne.s32.totalorder %s161, %s163
      %p167 = scmp.eq.s32.totalorder %s22, 0
      %p168 = por %p166, %p167
      %p169 = scmp.ne.s32.totalorder %s161, %s163
      %p170 = scmp.eq.s32.totalorder %s27, 1
      %p171 = por %p169, %p170
      %p172 = scmp.ne.s32.totalorder %s163, %s164
      %p173 = scmp.eq.s32.totalorder %s27, 0
      %p174 = por %p172, %p173
      %p175 = scmp.ne.s32.totalorder %s163, %s164
      %p176 = scmp.eq.s32.totalorder %s28, 1
      %p177 = por %p175, %p176
      %p179 = scmp.ne.s32.totalorder %s164, %s178
      %p180 = scmp.eq.s32.totalorder %s28, 0
      %p181 = por %p179, %p180
      %s183 = sadd.s32 %s182, 1
      %p186 = scmp.eq.s32.totalorder %s22, 1
      %p187 = scmp.ne.s32.totalorder %s182, %s184
      %p188 = scmp.eq.s32.totalorder %s22, 0
      %p189 = por %p187, %p188
      %p190 = scmp.ne.s32.totalorder %s182, %s184
      %p191 = scmp.eq.s32.totalorder %s27, 1
      %p192 = por %p190, %p191
      %p193 = scmp.ne.s32.totalorder %s184, %s185
      %p194 = scmp.eq.s32.totalorder %s27, 0
      %p195 = por %p193, %p194
      %p196 = scmp.ne.s32.totalorder %s184, %s185
      %p197 = scmp.eq.s32.totalorder %s28, 1
      %p198 = por %p196, %p197
      %p200 = scmp.ne.s32.totalorder %s185, %s199
      %p201 = scmp.eq.s32.totalorder %s28, 0
      %p202 = por %p200, %p201
      %s204 = sadd.s32 %s203, 1
      %p207 = scmp.eq.s32.totalorder %s22, 1
      %p208 = scmp.ne.s32.totalorder %s203, %s205
      %p209 = scmp.eq.s32.totalorder %s22, 0
      %p210 = por %p208, %p209
      %p211 = scmp.ne.s32.totalorder %s203, %s205
      %p212 = scmp.eq.s32.totalorder %s27, 1
      %p213 = por %p211, %p212
      %p214 = scmp.ne.s32.totalorder %s205, %s206
      %p215 = scmp.eq.s32.totalorder %s27, 0
      %p216 = por %p214, %p215
      %p217 = scmp.ne.s32.totalorder %s205, %s206
      %p218 = scmp.eq.s32.totalorder %s28, 1
      %p219 = por %p217, %p218
      %p221 = scmp.ne.s32.totalorder %s206, %s220
      %p222 = scmp.eq.s32.totalorder %s28, 0
      %p223 = por %p221, %p222
      %s225 = sadd.s32 %s224, 1
      %p228 = scmp.eq.s32.totalorder %s22, 1
      %p229 = scmp.ne.s32.totalorder %s224, %s226
      %p230 = scmp.eq.s32.totalorder %s22, 0
      %p231 = por %p229, %p230
      %p232 = scmp.ne.s32.totalorder %s224, %s226
      %p233 = scmp.eq.s32.totalorder %s27, 1
      %p234 = por %p232, %p233
      %p235 = scmp.ne.s32.totalorder %s226, %s227
      %p236 = scmp.eq.s32.totalorder %s27, 0
      %p237 = por %p235, %p236
      %p238 = scmp.ne.s32.totalorder %s226, %s227
      %p239 = scmp.eq.s32.totalorder %s28, 1
      %p240 = por %p238, %p239
      %p242 = scmp.ne.s32.totalorder %s227, %s241
      %p243 = scmp.eq.s32.totalorder %s28, 0
      %p244 = por %p242, %p243
      %s246 = sadd.s32 %s245, 1
      %p249 = scmp.eq.s32.totalorder %s22, 1
      %p250 = scmp.ne.s32.totalorder %s245, %s247
      %p251 = scmp.eq.s32.totalorder %s22, 0
      %p252 = por %p250, %p251
      %p253 = scmp.ne.s32.totalorder %s245, %s247
      %p254 = scmp.eq.s32.totalorder %s27, 1
      %p255 = por %p253, %p254
      %p256 = scmp.ne.s32.totalorder %s247, %s248
      %p257 = scmp.eq.s32.totalorder %s27, 0
      %p258 = por %p256, %p257
      %p259 = scmp.ne.s32.totalorder %s247, %s248
      %p260 = scmp.eq.s32.totalorder %s28, 1
      %p261 = por %p259, %p260
      %p263 = scmp.ne.s32.totalorder %s248, %s262
      %p264 = scmp.eq.s32.totalorder %s28, 0
      %p265 = por %p263, %p264
      %s267 = sadd.s32 %s266, 1
      %p270 = scmp.eq.s32.totalorder %s22, 1
      %p271 = scmp.ne.s32.totalorder %s266, %s268
      %p272 = scmp.eq.s32.totalorder %s22, 0
      %p273 = por %p271, %p272
      %p274 = scmp.ne.s32.totalorder %s266, %s268
      %p275 = scmp.eq.s32.totalorder %s27, 1
      %p276 = por %p274, %p275
      %p277 = scmp.ne.s32.totalorder %s268, %s269
      %p278 = scmp.eq.s32.totalorder %s27, 0
      %p279 = por %p277, %p278
      %p280 = scmp.ne.s32.totalorder %s268, %s269
      %p281 = scmp.eq.s32.totalorder %s28, 1
      %p282 = por %p280, %p281
      %p284 = scmp.ne.s32.totalorder %s269, %s283
      %p285 = scmp.eq.s32.totalorder %s28, 0
      %p286 = por %p284, %p285
      %s288 = sadd.s32 %s287, 1
      %p291 = scmp.eq.s32.totalorder %s22, 1
      %p292 = scmp.ne.s32.totalorder %s287, %s289
      %p293 = scmp.eq.s32.totalorder %s22, 0
      %p294 = por %p292, %p293
      %p295 = scmp.ne.s32.totalorder %s287, %s289
      %p296 = scmp.eq.s32.totalorder %s27, 1
      %p297 = por %p295, %p296
      %p298 = scmp.ne.s32.totalorder %s289, %s290
      %p299 = scmp.eq.s32.totalorder %s27, 0
      %p300 = por %p298, %p299
      %p301 = scmp.ne.s32.totalorder %s289, %s290
      %p302 = scmp.eq.s32.totalorder %s28, 1
      %p303 = por %p301, %p302
      %p305 = scmp.ne.s32.totalorder %s290, %s304
      %p306 = scmp.eq.s32.totalorder %s28, 0
      %p307 = por %p305, %p306
      %s308 = ssub.s32 %s22, %s29
      %p309 = scmp.eq.s32.totalorder %s308, 0
      %s311 = sadd.s32 %s310, 1
      %s312 = scalar_select %p309, %s310, %s311
      %p315 = pneg %p309
      %p316 = scmp.eq.s32.totalorder %s22, 1
      %p317 = por %p315, %p316
      %p318 = scmp.ne.s32.totalorder %s310, %s313
      %p319 = scmp.eq.s32.totalorder %s22, 0
      %p320 = por %p318, %p319
      %p321 = scmp.ne.s32.totalorder %s310, %s313
      %p322 = scmp.eq.s32.totalorder %s27, 1
      %p323 = por %p321, %p322
      %p324 = scmp.ne.s32.totalorder %s313, %s314
      %p325 = scmp.eq.s32.totalorder %s27, 0
      %p326 = por %p324, %p325
      %p327 = scmp.ne.s32.totalorder %s313, %s314
      %p328 = scmp.eq.s32.totalorder %s28, 1
      %p329 = por %p327, %p328
      %p331 = scmp.ne.s32.totalorder %s314, %s330
      %p332 = scmp.eq.s32.totalorder %s28, 0
      %p333 = por %p331, %p332
      %p334 = scmp.le.s32.totalorder 1, %s22
      %p335 = scmp.lt.s32.totalorder %s22, 3
      %p336 = pnand %p334, %p335
      %p337 = pneg %p336
      // Predicated region
      $region9: #{tpu_custom_call.1} parent=5 // pred_check
        _
      $region10: #{tpu_custom_call.1} parent=5 // pred_check_branch
        %339 = sbr.rel (%p336) target = $region12
      $region11: #{tpu_custom_call.1} parent=5 // pred_region
        %s340 = ssub.s32 %s22, 1
        // Predicated region
        $region13: #{tpu_custom_call.1} parent=11 // pred_check
          %p341 = pneg %p69
        $region14: #{tpu_custom_call.1} parent=11 // pred_check_branch
          %343 = sbr.rel (%p341) target = $region16
        $region15: #{tpu_custom_call.1} parent=11 // pred_region
          _
        $region16: #{tpu_custom_call.1} parent=11 // pred_fallthru
          _
        // Predicated region
        $region17: #{tpu_custom_call.1} parent=11 // pred_check
          %p344 = pneg %p90
        $region18: #{tpu_custom_call.1} parent=11 // pred_check_branch
          %346 = sbr.rel (%p344) target = $region20
        $region19: #{tpu_custom_call.1} parent=11 // pred_region
          _
        $region20: #{tpu_custom_call.1} parent=11 // pred_fallthru
          _
        // Predicated region
        $region21: #{tpu_custom_call.1} parent=11 // pred_check
          %p347 = pneg %p111
        $region22: #{tpu_custom_call.1} parent=11 // pred_check_branch
          %349 = sbr.rel (%p347) target = $region24
        $region23: #{tpu_custom_call.1} parent=11 // pred_region
          _
        $region24: #{tpu_custom_call.1} parent=11 // pred_fallthru
          _
        // Predicated region
        $region25: #{tpu_custom_call.1} parent=11 // pred_check
          %p350 = pneg %p132
        $region26: #{tpu_custom_call.1} parent=11 // pred_check_branch
          %352 = sbr.rel (%p350) target = $region28
        $region27: #{tpu_custom_call.1} parent=11 // pred_region
          _
        $region28: #{tpu_custom_call.1} parent=11 // pred_fallthru
          _
        // Predicated region
        $region29: #{tpu_custom_call.1} parent=11 // pred_check
          %p353 = pneg %p153
        $region30: #{tpu_custom_call.1} parent=11 // pred_check_branch
          %355 = sbr.rel (%p353) target = $region32
        $region31: #{tpu_custom_call.1} parent=11 // pred_region
          _
        $region32: #{tpu_custom_call.1} parent=11 // pred_fallthru
          _
        // Predicated region
        $region33: #{tpu_custom_call.1} parent=11 // pred_check
          %p356 = pneg %p174
        $region34: #{tpu_custom_call.1} parent=11 // pred_check_branch
          %358 = sbr.rel (%p356) target = $region36
        $region35: #{tpu_custom_call.1} parent=11 // pred_region
          _
        $region36: #{tpu_custom_call.1} parent=11 // pred_fallthru
          _
        // Predicated region
        $region37: #{tpu_custom_call.1} parent=11 // pred_check
          %p359 = pneg %p195
        $region38: #{tpu_custom_call.1} parent=11 // pred_check_branch
          %361 = sbr.rel (%p359) target = $region40
        $region39: #{tpu_custom_call.1} parent=11 // pred_region
          _
        $region40: #{tpu_custom_call.1} parent=11 // pred_fallthru
          _
        // Predicated region
        $region41: #{tpu_custom_call.1} parent=11 // pred_check
          %p362 = pneg %p216
        $region42: #{tpu_custom_call.1} parent=11 // pred_check_branch
          %364 = sbr.rel (%p362) target = $region44
        $region43: #{tpu_custom_call.1} parent=11 // pred_region
          _
        $region44: #{tpu_custom_call.1} parent=11 // pred_fallthru
          _
        // Predicated region
        $region45: #{tpu_custom_call.1} parent=11 // pred_check
          %p365 = pneg %p237
        $region46: #{tpu_custom_call.1} parent=11 // pred_check_branch
          %367 = sbr.rel (%p365) target = $region48
        $region47: #{tpu_custom_call.1} parent=11 // pred_region
          _
        $region48: #{tpu_custom_call.1} parent=11 // pred_fallthru
          _
        // Predicated region
        $region49: #{tpu_custom_call.1} parent=11 // pred_check
          %p368 = pneg %p258
        $region50: #{tpu_custom_call.1} parent=11 // pred_check_branch
          %370 = sbr.rel (%p368) target = $region52
        $region51: #{tpu_custom_call.1} parent=11 // pred_region
          _
        $region52: #{tpu_custom_call.1} parent=11 // pred_fallthru
          _
        // Predicated region
        $region53: #{tpu_custom_call.1} parent=11 // pred_check
          %p371 = pneg %p279
        $region54: #{tpu_custom_call.1} parent=11 // pred_check_branch
          %373 = sbr.rel (%p371) target = $region56
        $region55: #{tpu_custom_call.1} parent=11 // pred_region
          _
        $region56: #{tpu_custom_call.1} parent=11 // pred_fallthru
          _
        // Predicated region
        $region57: #{tpu_custom_call.1} parent=11 // pred_check
          %p374 = pneg %p300
        $region58: #{tpu_custom_call.1} parent=11 // pred_check_branch
          %376 = sbr.rel (%p374) target = $region60
        $region59: #{tpu_custom_call.1} parent=11 // pred_region
          _
        $region60: #{tpu_custom_call.1} parent=11 // pred_fallthru
          _
      $region12: #{tpu_custom_call.1} parent=5 // pred_fallthru
        _
      %p377 = scmp.lt.s32.totalorder %s22, 2
      // Predicated region
      $region61: #{tpu_custom_call.1} parent=5 // pred_check
        %p378 = pneg %p377
      $region62: #{tpu_custom_call.1} parent=5 // pred_check_branch
        %380 = sbr.rel (%p378) target = $region64
      $region63: #{tpu_custom_call.1} parent=5 // pred_region
        // Predicated region
        $region65: #{tpu_custom_call.1} parent=63 // pred_check
          %p381 = pneg %p42
        $region66: #{tpu_custom_call.1} parent=63 // pred_check_branch
          %383 = sbr.rel (%p381) target = $region68
        $region67: #{tpu_custom_call.1} parent=63 // pred_region
          %p384 = scmp.lt.s32.totalorder %s22, 1
          %s385 = scalar_select %p384, %s22, 1
          %s386 = smul.addr %s385, 2
          %s387 = smul.addr %s386, 8
          %s388 = scalar_lea.vmem %s0, %s387
        $region68: #{tpu_custom_call.1} parent=63 // pred_fallthru
          _
      $region64: #{tpu_custom_call.1} parent=5 // pred_fallthru
        _
      %p389 = scmp.le.s32.totalorder 1, %s22
      %p390 = scmp.lt.s32.totalorder %s22, 3
      %p391 = pnand %p389, %p390
      %p392 = pneg %p391
      // Predicated region
      $region69: #{tpu_custom_call.1} parent=5 // pred_check
        _
      $region70: #{tpu_custom_call.1} parent=5 // pred_check_branch
        %394 = sbr.rel (%p391) target = $region72
      $region71: #{tpu_custom_call.1} parent=5 // pred_region
        %s395 = ssub.s32 %s22, 1
        %p396 = scmp.lt.s32.totalorder %s27, 1
        %s397 = scalar_select %p396, %s27, 1
        %s398 = smul.addr %s397, 2
        %s399 = smul.addr %s398, 8
        %s400 = scalar_lea.vmem %s0, %s399
        %p401 = pneg %p48
        %p402 = pneg %p45
        %p403 = pneg %p69
        %p404 = pneg %p66
        %p405 = pneg %p90
        %p406 = pneg %p87
        %p407 = pneg %p111
        %p408 = pneg %p108
        %p409 = pneg %p132
        %p410 = pneg %p129
        %p411 = pneg %p153
        %p412 = pneg %p150
        %p413 = pneg %p174
        %p414 = pneg %p171
        %p415 = pneg %p195
        %p416 = pneg %p192
        %p417 = pneg %p216
        %p418 = pneg %p213
        %p419 = pneg %p237
        %p420 = pneg %p234
        %p421 = pneg %p258
        %p422 = pneg %p255
        %p423 = pneg %p279
        %p424 = pneg %p276
        %p425 = pneg %p300
        %p426 = pneg %p297
        %p427 = pneg %p326
        %p428 = pneg %p323
        %s429 = sand.u32 %s313, 1
        %s430 = scalar_lea.sflag [#allocation3], %s429
        %s431 = sand.u32 %s313, 1
        %s432 = smul.addr %s431, 32
        %s433 = scalar_lea.vmem [#allocation2], %s432
        %p434 = scmp.lt.s32.totalorder %s27, 1
        %s435 = scalar_select %p434, %s27, 1
        %s436 = smul.addr %s435, 2
        %s437 = smul.addr %s436, 8
        %s438 = scalar_lea.vmem %s0, %s437
        %v439 = vld [vmem:[%s438] sm:$0xff]
        %v440 = vld [vmem:[%s438 + $0x8] sm:$0xff]
        %v441 = vld [vmem:[%s1] sm:$0xff]
        %v442 = vld [vmem:[%s1 + $0x8] sm:$0xff]
        %v443 = vld [vmem:[%s1 + $0x10] sm:$0x1]
        %v444 = vld [vmem:[%s1 + $0x18] sm:$0x1]
        %445 = vrot.lane.b32.xlu0 %v441, 1
        %v446 = vpop.permute.xlu0 %445
        %447 = vrot.lane.b32.xlu0 %v442, 1
        %v448 = vpop.permute.xlu0 %447
        %v449 = vlaneseq
        %v450 = vand.u32 %v449, 127
        %vm451 = vcmp.lt.s32.totalorder %v450, 1
        %v452 = vsel %vm451, %v446, %v448
        %v453 = vsel %vm451, %v448, %v446
        %454 = vrot.lane.b32.xlu0 %v441, 15
        %v455 = vpop.permute.xlu0 %454
        %456 = vrot.lane.b32.xlu0 %v442, 15
        %v457 = vpop.permute.xlu0 %456
        %vm458 = vcmp.lt.s32.totalorder %v450, 15
        %v459 = vsel %vm458, %v455, %v457
        %v460 = vsel %vm458, %v457, %v455
        %461 = vrot.lane.b32.xlu0 %v441, 16
        %v462 = vpop.permute.xlu0 %461
        %463 = vrot.lane.b32.xlu0 %v442, 16
        %v464 = vpop.permute.xlu0 %463
        %vm465 = vcmp.lt.s32.totalorder %v450, 16
        %v466 = vsel %vm465, %v462, %v464
        %v467 = vsel %vm465, %v464, %v462
        %468 = vrot.lane.b32.xlu0 %v441, 17
        %v469 = vpop.permute.xlu0 %468
        %470 = vrot.lane.b32.xlu0 %v442, 17
        %v471 = vpop.permute.xlu0 %470
        %vm472 = vcmp.lt.s32.totalorder %v450, 17
        %v473 = vsel %vm472, %v469, %v471
        %v474 = vsel %vm472, %v471, %v469
        %475 = vrot.lane.b32.xlu0 %v441, 111
        %v476 = vpop.permute.xlu0 %475
        %477 = vrot.lane.b32.xlu0 %v442, 111
        %v478 = vpop.permute.xlu0 %477
        %vm479 = vcmp.lt.s32.totalorder %v450, 111
        %v480 = vsel %vm479, %v476, %v478
        %v481 = vsel %vm479, %v478, %v476
        %482 = vrot.lane.b32.xlu0 %v441, 112
        %v483 = vpop.permute.xlu0 %482
        %484 = vrot.lane.b32.xlu0 %v442, 112
        %v485 = vpop.permute.xlu0 %484
        %vm486 = vcmp.lt.s32.totalorder %v450, 112
        %v487 = vsel %vm486, %v483, %v485
        %v488 = vsel %vm486, %v485, %v483
        %489 = vrot.lane.b32.xlu0 %v441, 113
        %v490 = vpop.permute.xlu0 %489
        %491 = vrot.lane.b32.xlu0 %v442, 113
        %v492 = vpop.permute.xlu0 %491
        %vm493 = vcmp.lt.s32.totalorder %v450, 113
        %v494 = vsel %vm493, %v490, %v492
        %v495 = vsel %vm493, %v492, %v490
        %496 = vrot.lane.b32.xlu0 %v441, 127
        %v497 = vpop.permute.xlu0 %496
        %498 = vrot.lane.b32.xlu0 %v442, 127
        %v499 = vpop.permute.xlu0 %498
        %vm500 = vcmp.lt.s32.totalorder %v450, 127
        %v501 = vsel %vm500, %v497, %v499
        %v502 = vsel %vm500, %v499, %v497
        %v503 = vrot.slane %v441, 1
        %v504 = vrot.slane %v442, 1
        %vm505 = vcmp.eq.s32.totalorder %v480, %v503
        %vm506 = vcmp.eq.s32.totalorder %v481, %v504
        %vm507 = vcmp.eq.s32.totalorder %v474, %v503
        %vm508 = vcmp.eq.s32.totalorder %v473, %v504
        %v509 = vrot.slane %v441, 2
        %v510 = vrot.slane %v442, 2
        %vm511 = vcmp.eq.s32.totalorder %v487, %v509
        %vm512 = vcmp.eq.s32.totalorder %v488, %v510
        %vm513 = vcmp.eq.s32.totalorder %v467, %v509
        %vm514 = vcmp.eq.s32.totalorder %v466, %v510
        %v515 = vrot.slane %v441, 3
        %v516 = vrot.slane %v442, 3
        %vm517 = vcmp.eq.s32.totalorder %v494, %v515
        %vm518 = vcmp.eq.s32.totalorder %v495, %v516
        %vm519 = vcmp.eq.s32.totalorder %v460, %v515
        %vm520 = vcmp.eq.s32.totalorder %v459, %v516
        %v521 = vrot.slane %v441, 4
        %v522 = vrot.slane %v442, 4
        %vm523 = vcmp.eq.s32.totalorder %v501, %v521
        %vm524 = vcmp.eq.s32.totalorder %v502, %v522
        %vm525 = vcmp.eq.s32.totalorder %v453, %v521
        %vm526 = vcmp.eq.s32.totalorder %v452, %v522
        %v527 = vrot.slane %v441, 5
        %v528 = vrot.slane %v442, 5
        %vm529 = vcmp.eq.s32.totalorder %v453, %v527
        %vm530 = vcmp.eq.s32.totalorder %v452, %v528
        %vm531 = vcmp.eq.s32.totalorder %v501, %v527
        %vm532 = vcmp.eq.s32.totalorder %v502, %v528
        %v533 = vrot.slane %v441, 6
        %v534 = vrot.slane %v442, 6
        %vm535 = vcmp.eq.s32.totalorder %v460, %v533
        %vm536 = vcmp.eq.s32.totalorder %v459, %v534
        %vm537 = vcmp.eq.s32.totalorder %v494, %v533
        %vm538 = vcmp.eq.s32.totalorder %v495, %v534
        %v539 = vrot.slane %v441, 7
        %v540 = vrot.slane %v442, 7
        %vm541 = vcmp.eq.s32.totalorder %v467, %v539
        %vm542 = vcmp.eq.s32.totalorder %v466, %v540
        %vm543 = vcmp.eq.s32.totalorder %v487, %v539
        %vm544 = vcmp.eq.s32.totalorder %v488, %v540
        %vm545 = vcmp.eq.s32.totalorder %v474, %v443
        %vm546 = vcmp.eq.s32.totalorder %v473, %v444
        %vm547 = vcmp.eq.s32.totalorder %v480, %v443
        %vm548 = vcmp.eq.s32.totalorder %v481, %v444
        %v549 = vld [vmem:[%s8] sm:$0xff]
        %v550 = vld [vmem:[%s8 + $0x8] sm:$0xff]
        %551 = vrot.lane.b32.xlu0 %v439, 1
        %v552 = vpop.permute.xlu0 %551
        %553 = vrot.lane.b32.xlu0 %v440, 1
        %v554 = vpop.permute.xlu0 %553
        %v555 = vsel %vm451, %v552, %v554
        %v556 = vsel %vm451, %v554, %v552
        %557 = vrot.lane.b32.xlu0 %v439, 15
        %v558 = vpop.permute.xlu0 %557
        %559 = vrot.lane.b32.xlu0 %v440, 15
        %v560 = vpop.permute.xlu0 %559
        %v561 = vsel %vm458, %v558, %v560
        %v562 = vsel %vm458, %v560, %v558
        %563 = vrot.lane.b32.xlu0 %v439, 16
        %v564 = vpop.permute.xlu0 %563
        %565 = vrot.lane.b32.xlu0 %v440, 16
        %v566 = vpop.permute.xlu0 %565
        %v567 = vsel %vm465, %v564, %v566
        %v568 = vsel %vm465, %v566, %v564
        %569 = vrot.lane.b32.xlu0 %v439, 17
        %v570 = vpop.permute.xlu0 %569
        %571 = vrot.lane.b32.xlu0 %v440, 17
        %v572 = vpop.permute.xlu0 %571
        %v573 = vsel %vm472, %v570, %v572
        %v574 = vsel %vm472, %v572, %v570
        %575 = vrot.lane.b32.xlu0 %v439, 111
        %v576 = vpop.permute.xlu0 %575
        %577 = vrot.lane.b32.xlu0 %v440, 111
        %v578 = vpop.permute.xlu0 %577
        %v579 = vsel %vm479, %v576, %v578
        %v580 = vsel %vm479, %v578, %v576
        %581 = vrot.lane.b32.xlu0 %v439, 112
        %v582 = vpop.permute.xlu0 %581
        %583 = vrot.lane.b32.xlu0 %v440, 112
        %v584 = vpop.permute.xlu0 %583
        %v585 = vsel %vm486, %v582, %v584
        %v586 = vsel %vm486, %v584, %v582
        %587 = vrot.lane.b32.xlu0 %v439, 113
        %v588 = vpop.permute.xlu0 %587
        %589 = vrot.lane.b32.xlu0 %v440, 113
        %v590 = vpop.permute.xlu0 %589
        %v591 = vsel %vm493, %v588, %v590
        %v592 = vsel %vm493, %v590, %v588
        %593 = vrot.lane.b32.xlu0 %v439, 127
        %v594 = vpop.permute.xlu0 %593
        %595 = vrot.lane.b32.xlu0 %v440, 127
        %v596 = vpop.permute.xlu0 %595
        %v597 = vsel %vm500, %v594, %v596
        %v598 = vsel %vm500, %v596, %v594
        %v599 = vsel %vm507, 1, 0
        %v600 = vsel %vm508, 1, 0
        %v601 = vlaneseq
        %v602 = vshrl.u32 %v601, 7
        %v603 = vsub.s32 0, %v602
        %v604 = vrot.slane %v599, %v603
        %v605 = vlaneseq
        %v606 = vshrl.u32 %v605, 7
        %v607 = vsub.s32 0, %v606
        %v608 = vrot.slane %v600, %v607
        %vm609 = vcmp.eq.s32.totalorder %v604, 1
        %vm610 = vcmp.eq.s32.totalorder %v608, 1
        %v611 = vsel %vm609, %v574, 0.0
        %v612 = vsel %vm610, %v573, 0.0
        %v613 = vsel %vm505, 1, 0
        %v614 = vsel %vm506, 1, 0
        %v615 = vlaneseq
        %v616 = vshrl.u32 %v615, 7
        %v617 = vsub.s32 0, %v616
        %v618 = vrot.slane %v613, %v617
        %v619 = vlaneseq
        %v620 = vshrl.u32 %v619, 7
        %v621 = vsub.s32 0, %v620
        %v622 = vrot.slane %v614, %v621
        %vm623 = vcmp.eq.s32.totalorder %v618, 1
        %vm624 = vcmp.eq.s32.totalorder %v622, 1
        %v625 = vsel %vm623, %v579, %v611
        %v626 = vsel %vm624, %v580, %v612
        %v627 = vsel %vm513, 1, 0
        %v628 = vsel %vm514, 1, 0
        %v629 = vlaneseq
        %v630 = vshrl.u32 %v629, 7
        %v631 = vsub.s32 0, %v630
        %v632 = vrot.slane %v627, %v631
        %v633 = vlaneseq
        %v634 = vshrl.u32 %v633, 7
        %v635 = vsub.s32 0, %v634
        %v636 = vrot.slane %v628, %v635
        %vm637 = vcmp.eq.s32.totalorder %v632, 1
        %vm638 = vcmp.eq.s32.totalorder %v636, 1
        %v639 = vsel %vm637, %v568, 0.0
        %v640 = vsel %vm638, %v567, 0.0
        %v641 = vsel %vm511, 1, 0
        %v642 = vsel %vm512, 1, 0
        %v643 = vlaneseq
        %v644 = vshrl.u32 %v643, 7
        %v645 = vsub.s32 0, %v644
        %v646 = vrot.slane %v641, %v645
        %v647 = vlaneseq
        %v648 = vshrl.u32 %v647, 7
        %v649 = vsub.s32 0, %v648
        %v650 = vrot.slane %v642, %v649
        %vm651 = vcmp.eq.s32.totalorder %v646, 1
        %vm652 = vcmp.eq.s32.totalorder %v650, 1
        %v653 = vsel %vm651, %v585, %v639
        %v654 = vsel %vm652, %v586, %v640
        %v655 = vsel %vm519, 1, 0
        %v656 = vsel %vm520, 1, 0
        %v657 = vlaneseq
        %v658 = vshrl.u32 %v657, 7
        %v659 = vsub.s32 0, %v658
        %v660 = vrot.slane %v655, %v659
        %v661 = vlaneseq
        %v662 = vshrl.u32 %v661, 7
        %v663 = vsub.s32 0, %v662
        %v664 = vrot.slane %v656, %v663
        %vm665 = vcmp.eq.s32.totalorder %v660, 1
        %vm666 = vcmp.eq.s32.totalorder %v664, 1
        %v667 = vsel %vm665, %v562, 0.0
        %v668 = vsel %vm666, %v561, 0.0
        %v669 = vsel %vm517, 1, 0
        %v670 = vsel %vm518, 1, 0
        %v671 = vlaneseq
        %v672 = vshrl.u32 %v671, 7
        %v673 = vsub.s32 0, %v672
        %v674 = vrot.slane %v669, %v673
        %v675 = vlaneseq
        %v676 = vshrl.u32 %v675, 7
        %v677 = vsub.s32 0, %v676
        %v678 = vrot.slane %v670, %v677
        %vm679 = vcmp.eq.s32.totalorder %v674, 1
        %vm680 = vcmp.eq.s32.totalorder %v678, 1
        %v681 = vsel %vm679, %v591, %v667
        %v682 = vsel %vm680, %v592, %v668
        %v683 = vsel %vm525, 1, 0
        %v684 = vsel %vm526, 1, 0
        %v685 = vlaneseq
        %v686 = vshrl.u32 %v685, 7
        %v687 = vsub.s32 0, %v686
        %v688 = vrot.slane %v683, %v687
        %v689 = vlaneseq
        %v690 = vshrl.u32 %v689, 7
        %v691 = vsub.s32 0, %v690
        %v692 = vrot.slane %v684, %v691
        %vm693 = vcmp.eq.s32.totalorder %v688, 1
        %vm694 = vcmp.eq.s32.totalorder %v692, 1
        %v695 = vsel %vm693, %v556, 0.0
        %v696 = vsel %vm694, %v555, 0.0
        %v697 = vsel %vm523, 1, 0
        %v698 = vsel %vm524, 1, 0
        %v699 = vlaneseq
        %v700 = vshrl.u32 %v699, 7
        %v701 = vsub.s32 0, %v700
        %v702 = vrot.slane %v697, %v701
        %v703 = vlaneseq
        %v704 = vshrl.u32 %v703, 7
        %v705 = vsub.s32 0, %v704
        %v706 = vrot.slane %v698, %v705
        %vm707 = vcmp.eq.s32.totalorder %v702, 1
        %vm708 = vcmp.eq.s32.totalorder %v706, 1
        %v709 = vsel %vm707, %v597, %v695
        %v710 = vsel %vm708, %v598, %v696
        %v711 = vsel %vm531, 1, 0
        %v712 = vsel %vm532, 1, 0
        %v713 = vlaneseq
        %v714 = vshrl.u32 %v713, 7
        %v715 = vsub.s32 0, %v714
        %v716 = vrot.slane %v711, %v715
        %v717 = vlaneseq
        %v718 = vshrl.u32 %v717, 7
        %v719 = vsub.s32 0, %v718
        %v720 = vrot.slane %v712, %v719
        %vm721 = vcmp.eq.s32.totalorder %v716, 1
        %vm722 = vcmp.eq.s32.totalorder %v720, 1
        %v723 = vsel %vm721, %v597, 0.0
        %v724 = vsel %vm722, %v598, 0.0
        %v725 = vsel %vm529, 1, 0
        %v726 = vsel %vm530, 1, 0
        %v727 = vlaneseq
        %v728 = vshrl.u32 %v727, 7
        %v729 = vsub.s32 0, %v728
        %v730 = vrot.slane %v725, %v729
        %v731 = vlaneseq
        %v732 = vshrl.u32 %v731, 7
        %v733 = vsub.s32 0, %v732
        %v734 = vrot.slane %v726, %v733
        %vm735 = vcmp.eq.s32.totalorder %v730, 1
        %vm736 = vcmp.eq.s32.totalorder %v734, 1
        %v737 = vsel %vm735, %v556, %v723
        %v738 = vsel %vm736, %v555, %v724
        %v739 = vsel %vm537, 1, 0
        %v740 = vsel %vm538, 1, 0
        %v741 = vlaneseq
        %v742 = vshrl.u32 %v741, 7
        %v743 = vsub.s32 0, %v742
        %v744 = vrot.slane %v739, %v743
        %v745 = vlaneseq
        %v746 = vshrl.u32 %v745, 7
        %v747 = vsub.s32 0, %v746
        %v748 = vrot.slane %v740, %v747
        %vm749 = vcmp.eq.s32.totalorder %v744, 1
        %vm750 = vcmp.eq.s32.totalorder %v748, 1
        %v751 = vsel %vm749, %v591, 0.0
        %v752 = vsel %vm750, %v592, 0.0
        %v753 = vsel %vm535, 1, 0
        %v754 = vsel %vm536, 1, 0
        %v755 = vlaneseq
        %v756 = vshrl.u32 %v755, 7
        %v757 = vsub.s32 0, %v756
        %v758 = vrot.slane %v753, %v757
        %v759 = vlaneseq
        %v760 = vshrl.u32 %v759, 7
        %v761 = vsub.s32 0, %v760
        %v762 = vrot.slane %v754, %v761
        %vm763 = vcmp.eq.s32.totalorder %v758, 1
        %vm764 = vcmp.eq.s32.totalorder %v762, 1
        %v765 = vsel %vm763, %v562, %v751
        %v766 = vsel %vm764, %v561, %v752
        %v767 = vsel %vm543, 1, 0
        %v768 = vsel %vm544, 1, 0
        %v769 = vlaneseq
        %v770 = vshrl.u32 %v769, 7
        %v771 = vsub.s32 0, %v770
        %v772 = vrot.slane %v767, %v771
        %v773 = vlaneseq
        %v774 = vshrl.u32 %v773, 7
        %v775 = vsub.s32 0, %v774
        %v776 = vrot.slane %v768, %v775
        %vm777 = vcmp.eq.s32.totalorder %v772, 1
        %vm778 = vcmp.eq.s32.totalorder %v776, 1
        %v779 = vsel %vm777, %v585, 0.0
        %v780 = vsel %vm778, %v586, 0.0
        %v781 = vsel %vm541, 1, 0
        %v782 = vsel %vm542, 1, 0
        %v783 = vlaneseq
        %v784 = vshrl.u32 %v783, 7
        %v785 = vsub.s32 0, %v784
        %v786 = vrot.slane %v781, %v785
        %v787 = vlaneseq
        %v788 = vshrl.u32 %v787, 7
        %v789 = vsub.s32 0, %v788
        %v790 = vrot.slane %v782, %v789
        %vm791 = vcmp.eq.s32.totalorder %v786, 1
        %vm792 = vcmp.eq.s32.totalorder %v790, 1
        %v793 = vsel %vm791, %v568, %v779
        %v794 = vsel %vm792, %v567, %v780
        %v795 = vsel %vm547, 1, 0
        %v796 = vsel %vm548, 1, 0
        %v797 = vlaneseq
        %v798 = vshrl.u32 %v797, 7
        %v799 = vsub.s32 0, %v798
        %v800 = vrot.slane %v795, %v799
        %v801 = vlaneseq
        %v802 = vshrl.u32 %v801, 7
        %v803 = vsub.s32 0, %v802
        %v804 = vrot.slane %v796, %v803
        %vm805 = vcmp.eq.s32.totalorder %v800, 1
        %vm806 = vcmp.eq.s32.totalorder %v804, 1
        %v807 = vsel %vm805, %v579, 0.0
        %v808 = vsel %vm806, %v580, 0.0
        %v809 = vsel %vm545, 1, 0
        %v810 = vsel %vm546, 1, 0
        %v811 = vlaneseq
        %v812 = vshrl.u32 %v811, 7
        %v813 = vsub.s32 0, %v812
        %v814 = vrot.slane %v809, %v813
        %v815 = vlaneseq
        %v816 = vshrl.u32 %v815, 7
        %v817 = vsub.s32 0, %v816
        %v818 = vrot.slane %v810, %v817
        %vm819 = vcmp.eq.s32.totalorder %v814, 1
        %vm820 = vcmp.eq.s32.totalorder %v818, 1
        %v821 = vsel %vm819, %v574, %v807
        %v822 = vsel %vm820, %v573, %v808
        %v823 = vld [vmem:[%s2] sm:$0xff]
        %v824 = vld [vmem:[%s5] sm:$0xff]
        %826 = vset.pattern.permute.xlu0 0
        %827 = vperm.xlu0 %826, %v824
        %v828 = vpop.permute.xlu0 %827
        %vm830 = vcmask 588800
        %v832 = vsel %vm830, %v823, 0
        %834 = vmatprep.subr.mxu0 0.0
        %835 = vmatpush1.msra.mxu0 0.0
        %836 = vmatprep.subr.mxu0 0.0
        %837 = vmatpush1.msra.mxu0 0.0
        %838 = vmatprep.subr.mxu0 0.0
        %839 = vmatpush1.msra.mxu0 0.0
        %840 = vmatprep.subr.mxu0 0.0
        %841 = vmatpush1.msra.mxu0 0.0
        %842 = vmatprep.subr.mxu0 0.0
        %843 = vmatpush1.msra.mxu0 0.0
        %844 = vmatprep.subr.mxu0 0.0
        %845 = vmatpush1.msra.mxu0 0.0
        %846 = vmatprep.subr.mxu0 0.0
        %847 = vmatpush1.msra.mxu0 0.0
        %848 = vmatprep.subr.mxu0 %v822
        %849 = vmatpush1.msra.mxu0 %v821
        %850 = vmatprep.subr.mxu0 %v794
        %851 = vmatpush1.msra.mxu0 %v793
        %852 = vmatprep.subr.mxu0 %v766
        %853 = vmatpush1.msra.mxu0 %v765
        %854 = vmatprep.subr.mxu0 %v738
        %855 = vmatpush1.msra.mxu0 %v737
        %856 = vmatprep.subr.mxu0 %v440
        %857 = vmatpush1.msra.mxu0 %v439
        %858 = vmatprep.subr.mxu0 %v710
        %859 = vmatpush1.msra.mxu0 %v709
        %860 = vmatprep.subr.mxu0 %v682
        %861 = vmatpush1.msra.mxu0 %v681
        %862 = vmatprep.subr.mxu0 %v654
        %863 = vmatpush1.msra.mxu0 %v653
        %864 = vmatprep.subr.mxu0 %v626
        %865 = vmatpush1.msra.mxu0 %v625
        %866 = vmatprep.subr.mxu0 0.0
        %867 = vmatpush2.msra.mxu0 0.0
        %868 = vmatprep.subr.mxu0 0.0
        %869 = vmatpush2.msra.mxu0 0.0
        %870 = vmatprep.subr.mxu0 0.0
        %871 = vmatpush2.msra.mxu0 0.0
        %872 = vmatprep.subr.mxu0 0.0
        %873 = vmatpush2.msra.mxu0 0.0
        %874 = vmatprep.subr.mxu0 0.0
        %875 = vmatpush2.msra.mxu0 0.0
        %876 = vmatprep.subr.mxu0 0.0
        %877 = vmatpush2.msra.mxu0 0.0
        %878 = vmatprep.subr.mxu0 0.0
        %879 = vmatpush2.msra.mxu0 0.0
        %880 = vmatprep.subr.mxu0 0.0
        %881 = vmatpush2.msra.mxu0 0.0
        %882 = vmatprep.subr.mxu0 0.0
        %883 = vmatpush2.msra.mxu0 0.0
        %884 = vmatprep.subr.mxu0 0.0
        %885 = vmatpush2.msra.mxu0 0.0
        %886 = vmatprep.subr.mxu0 0.0
        %887 = vmatpush2.msra.mxu0 0.0
        %888 = vmatprep.subr.mxu0 0.0
        %889 = vmatpush2.msra.mxu0 0.0
        %890 = vmatprep.subr.mxu0 0.0
        %891 = vmatpush2.msra.mxu0 0.0
        %892 = vmatprep.subr.mxu0 0.0
        %893 = vmatpush2.msra.mxu0 0.0
        %894 = vmatprep.subr.mxu0 0.0
        %895 = vmatpush2.msra.mxu0 0.0
        %896 = vmatprep.subr.mxu0 0.0
        %897 = vmatpush2.msra.mxu0 0.0
        %898 = vmatprep.mubr.f32.mxu0 0.0
        %899 = vmatmul.mubr.f32.gmra.mxu0 %v832
        %v900 = vpop.f32.mrf.mxu0
        %v901 = vadd.f32 %v828, %v900
        %v902 = vpop.f32.mrf.mxu0
        %v903 = vadd.f32 %v828, %v902
        %904 = vdwg.mxu0
        %v905 = vmax.f32 %v901, 0.0
        %v906 = vmax.f32 %v903, 0.0
        %v907 = vld [vmem:[%s9] sm:$0xff]
        %v908 = vld [vmem:[%s9 + $0x8] sm:$0xff]
        %vm909 = vcmask 64512
        %v911 = vsel %vm909, %v907, 0
        %v914 = vsel %vm909, %v908, 0
        %916 = vmatprep.subr.mxu0 0.0
        %917 = vmatpush1.msra.mxu0 0.0
        %918 = vmatprep.subr.mxu0 0.0
        %919 = vmatpush1.msra.mxu0 0.0
        %920 = vmatprep.subr.mxu0 0.0
        %921 = vmatpush1.msra.mxu0 0.0
        %922 = vmatprep.subr.mxu0 0.0
        %923 = vmatpush1.msra.mxu0 0.0
        %924 = vmatprep.subr.mxu0 0.0
        %925 = vmatpush1.msra.mxu0 0.0
        %926 = vmatprep.subr.mxu0 0.0
        %927 = vmatpush1.msra.mxu0 0.0
        %928 = vmatprep.subr.mxu0 0.0
        %929 = vmatpush1.msra.mxu0 0.0
        %930 = vmatprep.subr.mxu0 0.0
        %931 = vmatpush1.msra.mxu0 0.0
        %932 = vmatprep.subr.mxu0 0.0
        %933 = vmatpush1.msra.mxu0 0.0
        %934 = vmatprep.subr.mxu0 0.0
        %935 = vmatpush1.msra.mxu0 0.0
        %936 = vmatprep.subr.mxu0 0.0
        %937 = vmatpush1.msra.mxu0 0.0
        %938 = vmatprep.subr.mxu0 0.0
        %939 = vmatpush1.msra.mxu0 0.0
        %940 = vmatprep.subr.mxu0 0.0
        %941 = vmatpush1.msra.mxu0 0.0
        %942 = vmatprep.subr.mxu0 0.0
        %943 = vmatpush1.msra.mxu0 0.0
        %944 = vmatprep.subr.mxu0 0.0
        %945 = vmatpush1.msra.mxu0 0.0
        %946 = vmatprep.subr.mxu0 %v906
        %947 = vmatpush1.msra.mxu0 %v905
        %948 = vmatprep.subr.mxu0 0.0
        %949 = vmatpush2.msra.mxu0 0.0
        %950 = vmatprep.subr.mxu0 0.0
        %951 = vmatpush2.msra.mxu0 0.0
        %952 = vmatprep.subr.mxu0 0.0
        %953 = vmatpush2.msra.mxu0 0.0
        %954 = vmatprep.subr.mxu0 0.0
        %955 = vmatpush2.msra.mxu0 0.0
        %956 = vmatprep.subr.mxu0 0.0
        %957 = vmatpush2.msra.mxu0 0.0
        %958 = vmatprep.subr.mxu0 0.0
        %959 = vmatpush2.msra.mxu0 0.0
        %960 = vmatprep.subr.mxu0 0.0
        %961 = vmatpush2.msra.mxu0 0.0
        %962 = vmatprep.subr.mxu0 0.0
        %963 = vmatpush2.msra.mxu0 0.0
        %964 = vmatprep.subr.mxu0 0.0
        %965 = vmatpush2.msra.mxu0 0.0
        %966 = vmatprep.subr.mxu0 0.0
        %967 = vmatpush2.msra.mxu0 0.0
        %968 = vmatprep.subr.mxu0 0.0
        %969 = vmatpush2.msra.mxu0 0.0
        %970 = vmatprep.subr.mxu0 0.0
        %971 = vmatpush2.msra.mxu0 0.0
        %972 = vmatprep.subr.mxu0 0.0
        %973 = vmatpush2.msra.mxu0 0.0
        %974 = vmatprep.subr.mxu0 0.0
        %975 = vmatpush2.msra.mxu0 0.0
        %976 = vmatprep.subr.mxu0 0.0
        %977 = vmatpush2.msra.mxu0 0.0
        %978 = vmatprep.subr.mxu0 0.0
        %979 = vmatpush2.msra.mxu0 0.0
        %980 = vmatprep.mubr.f32.mxu0 0.0
        %981 = vmatmul.mubr.f32.gmra.mxu0 %v911
        %v982 = vpop.f32.mrf.mxu0
        %v983 = vadd.f32 0.0, %v982
        %v984 = vpop.f32.mrf.mxu0
        %v985 = vadd.f32 0.0, %v984
        %986 = vmatprep.mubr.f32.mxu0 0.0
        %987 = vmatmul.mubr.f32.gmra.mxu0 %v914
        %v988 = vpop.f32.mrf.mxu0
        %v989 = vadd.f32 0.0, %v988
        %v990 = vpop.f32.mrf.mxu0
        %v991 = vadd.f32 0.0, %v990
        %992 = vdwg.mxu0
        %v994 = vsel %vm909, %v549, 0
        %v997 = vsel %vm909, %v550, 0
        %999 = vmatprep.subr.mxu0 0.0
        %1000 = vmatpush1.msra.mxu0 0.0
        %1001 = vmatprep.subr.mxu0 0.0
        %1002 = vmatpush1.msra.mxu0 0.0
        %1003 = vmatprep.subr.mxu0 0.0
        %1004 = vmatpush1.msra.mxu0 0.0
        %1005 = vmatprep.subr.mxu0 0.0
        %1006 = vmatpush1.msra.mxu0 0.0
        %1007 = vmatprep.subr.mxu0 0.0
        %1008 = vmatpush1.msra.mxu0 0.0
        %1009 = vmatprep.subr.mxu0 0.0
        %1010 = vmatpush1.msra.mxu0 0.0
        %1011 = vmatprep.subr.mxu0 0.0
        %1012 = vmatpush1.msra.mxu0 0.0
        %1013 = vmatprep.subr.mxu0 0.0
        %1014 = vmatpush1.msra.mxu0 0.0
        %1015 = vmatprep.subr.mxu0 0.0
        %1016 = vmatpush1.msra.mxu0 0.0
        %1017 = vmatprep.subr.mxu0 0.0
        %1018 = vmatpush1.msra.mxu0 0.0
        %1019 = vmatprep.subr.mxu0 0.0
        %1020 = vmatpush1.msra.mxu0 0.0
        %1021 = vmatprep.subr.mxu0 0.0
        %1022 = vmatpush1.msra.mxu0 0.0
        %1023 = vmatprep.subr.mxu0 0.0
        %1024 = vmatpush1.msra.mxu0 0.0
        %1025 = vmatprep.subr.mxu0 0.0
        %1026 = vmatpush1.msra.mxu0 0.0
        %1027 = vmatprep.subr.mxu0 0.0
        %1028 = vmatpush1.msra.mxu0 0.0
        %1029 = vmatprep.subr.mxu0 %v440
        %1030 = vmatpush1.msra.mxu0 %v439
        %1031 = vmatprep.subr.mxu0 0.0
        %1032 = vmatpush2.msra.mxu0 0.0
        %1033 = vmatprep.subr.mxu0 0.0
        %1034 = vmatpush2.msra.mxu0 0.0
        %1035 = vmatprep.subr.mxu0 0.0
        %1036 = vmatpush2.msra.mxu0 0.0
        %1037 = vmatprep.subr.mxu0 0.0
        %1038 = vmatpush2.msra.mxu0 0.0
        %1039 = vmatprep.subr.mxu0 0.0
        %1040 = vmatpush2.msra.mxu0 0.0
        %1041 = vmatprep.subr.mxu0 0.0
        %1042 = vmatpush2.msra.mxu0 0.0
        %1043 = vmatprep.subr.mxu0 0.0
        %1044 = vmatpush2.msra.mxu0 0.0
        %1045 = vmatprep.subr.mxu0 0.0
        %1046 = vmatpush2.msra.mxu0 0.0
        %1047 = vmatprep.subr.mxu0 0.0
        %1048 = vmatpush2.msra.mxu0 0.0
        %1049 = vmatprep.subr.mxu0 0.0
        %1050 = vmatpush2.msra.mxu0 0.0
        %1051 = vmatprep.subr.mxu0 0.0
        %1052 = vmatpush2.msra.mxu0 0.0
        %1053 = vmatprep.subr.mxu0 0.0
        %1054 = vmatpush2.msra.mxu0 0.0
        %1055 = vmatprep.subr.mxu0 0.0
        %1056 = vmatpush2.msra.mxu0 0.0
        %1057 = vmatprep.subr.mxu0 0.0
        %1058 = vmatpush2.msra.mxu0 0.0
        %1059 = vmatprep.subr.mxu0 0.0
        %1060 = vmatpush2.msra.mxu0 0.0
        %1061 = vmatprep.subr.mxu0 0.0
        %1062 = vmatpush2.msra.mxu0 0.0
        %1063 = vmatprep.mubr.f32.mxu0 0.0
        %1064 = vmatmul.mubr.f32.gmra.mxu0 %v994
        %v1065 = vpop.f32.mrf.mxu0
        %v1066 = vadd.f32 %v983, %v1065
        %v1067 = vpop.f32.mrf.mxu0
        %v1068 = vadd.f32 %v985, %v1067
        %1069 = vmatprep.mubr.f32.mxu0 0.0
        %1070 = vmatmul.mubr.f32.gmra.mxu0 %v997
        %v1071 = vpop.f32.mrf.mxu0
        %v1072 = vadd.f32 %v989, %v1071
        %v1073 = vpop.f32.mrf.mxu0
        %v1074 = vadd.f32 %v991, %v1073
        %1075 = vdwg.mxu0
        %1076 = vrot.lane.b32.xlu0 %v905, 1
        %v1077 = vpop.permute.xlu0 %1076
        %1078 = vrot.lane.b32.xlu0 %v906, 1
        %v1079 = vpop.permute.xlu0 %1078
        %v1080 = vsel %vm451, %v1077, %v1079
        %v1081 = vsel %vm451, %v1079, %v1077
        %1082 = vrot.lane.b32.xlu0 %v905, 15
        %v1083 = vpop.permute.xlu0 %1082
        %1084 = vrot.lane.b32.xlu0 %v906, 15
        %v1085 = vpop.permute.xlu0 %1084
        %v1086 = vsel %vm458, %v1083, %v1085
        %v1087 = vsel %vm458, %v1085, %v1083
        %1088 = vrot.lane.b32.xlu0 %v905, 16
        %v1089 = vpop.permute.xlu0 %1088
        %1090 = vrot.lane.b32.xlu0 %v906, 16
        %v1091 = vpop.permute.xlu0 %1090
        %v1092 = vsel %vm465, %v1089, %v1091
        %v1093 = vsel %vm465, %v1091, %v1089
        %1094 = vrot.lane.b32.xlu0 %v905, 17
        %v1095 = vpop.permute.xlu0 %1094
        %1096 = vrot.lane.b32.xlu0 %v906, 17
        %v1097 = vpop.permute.xlu0 %1096
        %v1098 = vsel %vm472, %v1095, %v1097
        %v1099 = vsel %vm472, %v1097, %v1095
        %1100 = vrot.lane.b32.xlu0 %v905, 111
        %v1101 = vpop.permute.xlu0 %1100
        %1102 = vrot.lane.b32.xlu0 %v906, 111
        %v1103 = vpop.permute.xlu0 %1102
        %v1104 = vsel %vm479, %v1101, %v1103
        %v1105 = vsel %vm479, %v1103, %v1101
        %1106 = vrot.lane.b32.xlu0 %v905, 112
        %v1107 = vpop.permute.xlu0 %1106
        %1108 = vrot.lane.b32.xlu0 %v906, 112
        %v1109 = vpop.permute.xlu0 %1108
        %v1110 = vsel %vm486, %v1107, %v1109
        %v1111 = vsel %vm486, %v1109, %v1107
        %1112 = vrot.lane.b32.xlu0 %v905, 113
        %v1113 = vpop.permute.xlu0 %1112
        %1114 = vrot.lane.b32.xlu0 %v906, 113
        %v1115 = vpop.permute.xlu0 %1114
        %v1116 = vsel %vm493, %v1113, %v1115
        %v1117 = vsel %vm493, %v1115, %v1113
        %1118 = vrot.lane.b32.xlu0 %v905, 127
        %v1119 = vpop.permute.xlu0 %1118
        %1120 = vrot.lane.b32.xlu0 %v906, 127
        %v1121 = vpop.permute.xlu0 %1120
        %v1122 = vsel %vm500, %v1119, %v1121
        %v1123 = vsel %vm500, %v1121, %v1119
        %v1124 = vsel %vm609, %v1099, 0.0
        %v1125 = vsel %vm610, %v1098, 0.0
        %v1126 = vsel %vm623, %v1104, %v1124
        %v1127 = vsel %vm624, %v1105, %v1125
        %v1128 = vsel %vm637, %v1093, 0.0
        %v1129 = vsel %vm638, %v1092, 0.0
        %v1130 = vsel %vm651, %v1110, %v1128
        %v1131 = vsel %vm652, %v1111, %v1129
        %v1132 = vsel %vm665, %v1087, 0.0
        %v1133 = vsel %vm666, %v1086, 0.0
        %v1134 = vsel %vm679, %v1116, %v1132
        %v1135 = vsel %vm680, %v1117, %v1133
        %v1136 = vsel %vm693, %v1081, 0.0
        %v1137 = vsel %vm694, %v1080, 0.0
        %v1138 = vsel %vm707, %v1122, %v1136
        %v1139 = vsel %vm708, %v1123, %v1137
        %v1140 = vsel %vm721, %v1122, 0.0
        %v1141 = vsel %vm722, %v1123, 0.0
        %v1142 = vsel %vm735, %v1081, %v1140
        %v1143 = vsel %vm736, %v1080, %v1141
        %v1144 = vsel %vm749, %v1116, 0.0
        %v1145 = vsel %vm750, %v1117, 0.0
        %v1146 = vsel %vm763, %v1087, %v1144
        %v1147 = vsel %vm764, %v1086, %v1145
        %v1148 = vsel %vm777, %v1110, 0.0
        %v1149 = vsel %vm778, %v1111, 0.0
        %v1150 = vsel %vm791, %v1093, %v1148
        %v1151 = vsel %vm792, %v1092, %v1149
        %v1152 = vsel %vm805, %v1104, 0.0
        %v1153 = vsel %vm806, %v1105, 0.0
        %v1154 = vsel %vm819, %v1099, %v1152
        %v1155 = vsel %vm820, %v1098, %v1153
        %v1156 = vld [vmem:[%s3] sm:$0xff]
        %v1157 = vld [vmem:[%s6] sm:$0xff]
        %1159 = vset.pattern.permute.xlu0 0
        %1160 = vperm.xlu0 %1159, %v1157
        %v1161 = vpop.permute.xlu0 %1160
        %v1164 = vsel %vm830, %v1156, 0
        %1166 = vmatprep.subr.mxu0 0.0
        %1167 = vmatpush1.msra.mxu0 0.0
        %1168 = vmatprep.subr.mxu0 0.0
        %1169 = vmatpush1.msra.mxu0 0.0
        %1170 = vmatprep.subr.mxu0 0.0
        %1171 = vmatpush1.msra.mxu0 0.0
        %1172 = vmatprep.subr.mxu0 0.0
        %1173 = vmatpush1.msra.mxu0 0.0
        %1174 = vmatprep.subr.mxu0 0.0
        %1175 = vmatpush1.msra.mxu0 0.0
        %1176 = vmatprep.subr.mxu0 0.0
        %1177 = vmatpush1.msra.mxu0 0.0
        %1178 = vmatprep.subr.mxu0 0.0
        %1179 = vmatpush1.msra.mxu0 0.0
        %1180 = vmatprep.subr.mxu0 %v1155
        %1181 = vmatpush1.msra.mxu0 %v1154
        %1182 = vmatprep.subr.mxu0 %v1151
        %1183 = vmatpush1.msra.mxu0 %v1150
        %1184 = vmatprep.subr.mxu0 %v1147
        %1185 = vmatpush1.msra.mxu0 %v1146
        %1186 = vmatprep.subr.mxu0 %v1143
        %1187 = vmatpush1.msra.mxu0 %v1142
        %1188 = vmatprep.subr.mxu0 %v906
        %1189 = vmatpush1.msra.mxu0 %v905
        %1190 = vmatprep.subr.mxu0 %v1139
        %1191 = vmatpush1.msra.mxu0 %v1138
        %1192 = vmatprep.subr.mxu0 %v1135
        %1193 = vmatpush1.msra.mxu0 %v1134
        %1194 = vmatprep.subr.mxu0 %v1131
        %1195 = vmatpush1.msra.mxu0 %v1130
        %1196 = vmatprep.subr.mxu0 %v1127
        %1197 = vmatpush1.msra.mxu0 %v1126
        %1198 = vmatprep.subr.mxu0 0.0
        %1199 = vmatpush2.msra.mxu0 0.0
        %1200 = vmatprep.subr.mxu0 0.0
        %1201 = vmatpush2.msra.mxu0 0.0
        %1202 = vmatprep.subr.mxu0 0.0
        %1203 = vmatpush2.msra.mxu0 0.0
        %1204 = vmatprep.subr.mxu0 0.0
        %1205 = vmatpush2.msra.mxu0 0.0
        %1206 = vmatprep.subr.mxu0 0.0
        %1207 = vmatpush2.msra.mxu0 0.0
        %1208 = vmatprep.subr.mxu0 0.0
        %1209 = vmatpush2.msra.mxu0 0.0
        %1210 = vmatprep.subr.mxu0 0.0
        %1211 = vmatpush2.msra.mxu0 0.0
        %1212 = vmatprep.subr.mxu0 0.0
        %1213 = vmatpush2.msra.mxu0 0.0
        %1214 = vmatprep.subr.mxu0 0.0
        %1215 = vmatpush2.msra.mxu0 0.0
        %1216 = vmatprep.subr.mxu0 0.0
        %1217 = vmatpush2.msra.mxu0 0.0
        %1218 = vmatprep.subr.mxu0 0.0
        %1219 = vmatpush2.msra.mxu0 0.0
        %1220 = vmatprep.subr.mxu0 0.0
        %1221 = vmatpush2.msra.mxu0 0.0
        %1222 = vmatprep.subr.mxu0 0.0
        %1223 = vmatpush2.msra.mxu0 0.0
        %1224 = vmatprep.subr.mxu0 0.0
        %1225 = vmatpush2.msra.mxu0 0.0
        %1226 = vmatprep.subr.mxu0 0.0
        %1227 = vmatpush2.msra.mxu0 0.0
        %1228 = vmatprep.subr.mxu0 0.0
        %1229 = vmatpush2.msra.mxu0 0.0
        %1230 = vmatprep.mubr.f32.mxu0 0.0
        %1231 = vmatmul.mubr.f32.gmra.mxu0 %v1164
        %v1232 = vpop.f32.mrf.mxu0
        %v1233 = vadd.f32 %v1161, %v1232
        %v1234 = vpop.f32.mrf.mxu0
        %v1235 = vadd.f32 %v1161, %v1234
        %1236 = vdwg.mxu0
        %v1237 = vmax.f32 %v1233, 0.0
        %v1238 = vmax.f32 %v1235, 0.0
        %v1239 = vld [vmem:[%s10] sm:$0xff]
        %v1240 = vld [vmem:[%s10 + $0x8] sm:$0xff]
        %v1242 = vsel %vm909, %v1239, 0
        %v1245 = vsel %vm909, %v1240, 0
        %1247 = vmatprep.subr.mxu0 0.0
        %1248 = vmatpush1.msra.mxu0 0.0
        %1249 = vmatprep.subr.mxu0 0.0
        %1250 = vmatpush1.msra.mxu0 0.0
        %1251 = vmatprep.subr.mxu0 0.0
        %1252 = vmatpush1.msra.mxu0 0.0
        %1253 = vmatprep.subr.mxu0 0.0
        %1254 = vmatpush1.msra.mxu0 0.0
        %1255 = vmatprep.subr.mxu0 0.0
        %1256 = vmatpush1.msra.mxu0 0.0
        %1257 = vmatprep.subr.mxu0 0.0
        %1258 = vmatpush1.msra.mxu0 0.0
        %1259 = vmatprep.subr.mxu0 0.0
        %1260 = vmatpush1.msra.mxu0 0.0
        %1261 = vmatprep.subr.mxu0 0.0
        %1262 = vmatpush1.msra.mxu0 0.0
        %1263 = vmatprep.subr.mxu0 0.0
        %1264 = vmatpush1.msra.mxu0 0.0
        %1265 = vmatprep.subr.mxu0 0.0
        %1266 = vmatpush1.msra.mxu0 0.0
        %1267 = vmatprep.subr.mxu0 0.0
        %1268 = vmatpush1.msra.mxu0 0.0
        %1269 = vmatprep.subr.mxu0 0.0
        %1270 = vmatpush1.msra.mxu0 0.0
        %1271 = vmatprep.subr.mxu0 0.0
        %1272 = vmatpush1.msra.mxu0 0.0
        %1273 = vmatprep.subr.mxu0 0.0
        %1274 = vmatpush1.msra.mxu0 0.0
        %1275 = vmatprep.subr.mxu0 0.0
        %1276 = vmatpush1.msra.mxu0 0.0
        %1277 = vmatprep.subr.mxu0 %v1238
        %1278 = vmatpush1.msra.mxu0 %v1237
        %1279 = vmatprep.subr.mxu0 0.0
        %1280 = vmatpush2.msra.mxu0 0.0
        %1281 = vmatprep.subr.mxu0 0.0
        %1282 = vmatpush2.msra.mxu0 0.0
        %1283 = vmatprep.subr.mxu0 0.0
        %1284 = vmatpush2.msra.mxu0 0.0
        %1285 = vmatprep.subr.mxu0 0.0
        %1286 = vmatpush2.msra.mxu0 0.0
        %1287 = vmatprep.subr.mxu0 0.0
        %1288 = vmatpush2.msra.mxu0 0.0
        %1289 = vmatprep.subr.mxu0 0.0
        %1290 = vmatpush2.msra.mxu0 0.0
        %1291 = vmatprep.subr.mxu0 0.0
        %1292 = vmatpush2.msra.mxu0 0.0
        %1293 = vmatprep.subr.mxu0 0.0
        %1294 = vmatpush2.msra.mxu0 0.0
        %1295 = vmatprep.subr.mxu0 0.0
        %1296 = vmatpush2.msra.mxu0 0.0
        %1297 = vmatprep.subr.mxu0 0.0
        %1298 = vmatpush2.msra.mxu0 0.0
        %1299 = vmatprep.subr.mxu0 0.0
        %1300 = vmatpush2.msra.mxu0 0.0
        %1301 = vmatprep.subr.mxu0 0.0
        %1302 = vmatpush2.msra.mxu0 0.0
        %1303 = vmatprep.subr.mxu0 0.0
        %1304 = vmatpush2.msra.mxu0 0.0
        %1305 = vmatprep.subr.mxu0 0.0
        %1306 = vmatpush2.msra.mxu0 0.0
        %1307 = vmatprep.subr.mxu0 0.0
        %1308 = vmatpush2.msra.mxu0 0.0
        %1309 = vmatprep.subr.mxu0 0.0
        %1310 = vmatpush2.msra.mxu0 0.0
        %1311 = vmatprep.mubr.f32.mxu0 0.0
        %1312 = vmatmul.mubr.f32.gmra.mxu0 %v1242
        %v1313 = vpop.f32.mrf.mxu0
        %v1314 = vadd.f32 0.0, %v1313
        %v1315 = vpop.f32.mrf.mxu0
        %v1316 = vadd.f32 0.0, %v1315
        %1317 = vmatprep.mubr.f32.mxu0 0.0
        %1318 = vmatmul.mubr.f32.gmra.mxu0 %v1245
        %v1319 = vpop.f32.mrf.mxu0
        %v1320 = vadd.f32 0.0, %v1319
        %v1321 = vpop.f32.mrf.mxu0
        %v1322 = vadd.f32 0.0, %v1321
        %1323 = vdwg.mxu0
        %v1324 = vadd.f32 %v1066, %v1314
        %v1325 = vadd.f32 %v1068, %v1316
        %v1326 = vadd.f32 %v1072, %v1320
        %v1327 = vadd.f32 %v1074, %v1322
        %1328 = vrot.lane.b32.xlu0 %v1237, 1
        %v1329 = vpop.permute.xlu0 %1328
        %1330 = vrot.lane.b32.xlu0 %v1238, 1
        %v1331 = vpop.permute.xlu0 %1330
        %v1332 = vsel %vm451, %v1329, %v1331
        %v1333 = vsel %vm451, %v1331, %v1329
        %1334 = vrot.lane.b32.xlu0 %v1237, 15
        %v1335 = vpop.permute.xlu0 %1334
        %1336 = vrot.lane.b32.xlu0 %v1238, 15
        %v1337 = vpop.permute.xlu0 %1336
        %v1338 = vsel %vm458, %v1335, %v1337
        %v1339 = vsel %vm458, %v1337, %v1335
        %1340 = vrot.lane.b32.xlu0 %v1237, 16
        %v1341 = vpop.permute.xlu0 %1340
        %1342 = vrot.lane.b32.xlu0 %v1238, 16
        %v1343 = vpop.permute.xlu0 %1342
        %v1344 = vsel %vm465, %v1341, %v1343
        %v1345 = vsel %vm465, %v1343, %v1341
        %1346 = vrot.lane.b32.xlu0 %v1237, 17
        %v1347 = vpop.permute.xlu0 %1346
        %1348 = vrot.lane.b32.xlu0 %v1238, 17
        %v1349 = vpop.permute.xlu0 %1348
        %v1350 = vsel %vm472, %v1347, %v1349
        %v1351 = vsel %vm472, %v1349, %v1347
        %1352 = vrot.lane.b32.xlu0 %v1237, 111
        %v1353 = vpop.permute.xlu0 %1352
        %1354 = vrot.lane.b32.xlu0 %v1238, 111
        %v1355 = vpop.permute.xlu0 %1354
        %v1356 = vsel %vm479, %v1353, %v1355
        %v1357 = vsel %vm479, %v1355, %v1353
        %1358 = vrot.lane.b32.xlu0 %v1237, 112
        %v1359 = vpop.permute.xlu0 %1358
        %1360 = vrot.lane.b32.xlu0 %v1238, 112
        %v1361 = vpop.permute.xlu0 %1360
        %v1362 = vsel %vm486, %v1359, %v1361
        %v1363 = vsel %vm486, %v1361, %v1359
        %1364 = vrot.lane.b32.xlu0 %v1237, 113
        %v1365 = vpop.permute.xlu0 %1364
        %1366 = vrot.lane.b32.xlu0 %v1238, 113
        %v1367 = vpop.permute.xlu0 %1366
        %v1368 = vsel %vm493, %v1365, %v1367
        %v1369 = vsel %vm493, %v1367, %v1365
        %1370 = vrot.lane.b32.xlu0 %v1237, 127
        %v1371 = vpop.permute.xlu0 %1370
        %1372 = vrot.lane.b32.xlu0 %v1238, 127
        %v1373 = vpop.permute.xlu0 %1372
        %v1374 = vsel %vm500, %v1371, %v1373
        %v1375 = vsel %vm500, %v1373, %v1371
        %v1376 = vsel %vm609, %v1351, 0.0
        %v1377 = vsel %vm610, %v1350, 0.0
        %v1378 = vsel %vm623, %v1356, %v1376
        %v1379 = vsel %vm624, %v1357, %v1377
        %v1380 = vsel %vm637, %v1345, 0.0
        %v1381 = vsel %vm638, %v1344, 0.0
        %v1382 = vsel %vm651, %v1362, %v1380
        %v1383 = vsel %vm652, %v1363, %v1381
        %v1384 = vsel %vm665, %v1339, 0.0
        %v1385 = vsel %vm666, %v1338, 0.0
        %v1386 = vsel %vm679, %v1368, %v1384
        %v1387 = vsel %vm680, %v1369, %v1385
        %v1388 = vsel %vm693, %v1333, 0.0
        %v1389 = vsel %vm694, %v1332, 0.0
        %v1390 = vsel %vm707, %v1374, %v1388
        %v1391 = vsel %vm708, %v1375, %v1389
        %v1392 = vsel %vm721, %v1374, 0.0
        %v1393 = vsel %vm722, %v1375, 0.0
        %v1394 = vsel %vm735, %v1333, %v1392
        %v1395 = vsel %vm736, %v1332, %v1393
        %v1396 = vsel %vm749, %v1368, 0.0
        %v1397 = vsel %vm750, %v1369, 0.0
        %v1398 = vsel %vm763, %v1339, %v1396
        %v1399 = vsel %vm764, %v1338, %v1397
        %v1400 = vsel %vm777, %v1362, 0.0
        %v1401 = vsel %vm778, %v1363, 0.0
        %v1402 = vsel %vm791, %v1345, %v1400
        %v1403 = vsel %vm792, %v1344, %v1401
        %v1404 = vsel %vm805, %v1356, 0.0
        %v1405 = vsel %vm806, %v1357, 0.0
        %v1406 = vsel %vm819, %v1351, %v1404
        %v1407 = vsel %vm820, %v1350, %v1405
        %v1408 = vld [vmem:[%s4] sm:$0xff]
        %v1409 = vld [vmem:[%s7] sm:$0xff]
        %1411 = vset.pattern.permute.xlu0 0
        %1412 = vperm.xlu0 %1411, %v1409
        %v1413 = vpop.permute.xlu0 %1412
        %v1416 = vsel %vm830, %v1408, 0
        %1418 = vmatprep.subr.mxu0 0.0
        %1419 = vmatpush1.msra.mxu0 0.0
        %1420 = vmatprep.subr.mxu0 0.0
        %1421 = vmatpush1.msra.mxu0 0.0
        %1422 = vmatprep.subr.mxu0 0.0
        %1423 = vmatpush1.msra.mxu0 0.0
        %1424 = vmatprep.subr.mxu0 0.0
        %1425 = vmatpush1.msra.mxu0 0.0
        %1426 = vmatprep.subr.mxu0 0.0
        %1427 = vmatpush1.msra.mxu0 0.0
        %1428 = vmatprep.subr.mxu0 0.0
        %1429 = vmatpush1.msra.mxu0 0.0
        %1430 = vmatprep.subr.mxu0 0.0
        %1431 = vmatpush1.msra.mxu0 0.0
        %1432 = vmatprep.subr.mxu0 %v1407
        %1433 = vmatpush1.msra.mxu0 %v1406
        %1434 = vmatprep.subr.mxu0 %v1403
        %1435 = vmatpush1.msra.mxu0 %v1402
        %1436 = vmatprep.subr.mxu0 %v1399
        %1437 = vmatpush1.msra.mxu0 %v1398
        %1438 = vmatprep.subr.mxu0 %v1395
        %1439 = vmatpush1.msra.mxu0 %v1394
        %1440 = vmatprep.subr.mxu0 %v1238
        %1441 = vmatpush1.msra.mxu0 %v1237
        %1442 = vmatprep.subr.mxu0 %v1391
        %1443 = vmatpush1.msra.mxu0 %v1390
        %1444 = vmatprep.subr.mxu0 %v1387
        %1445 = vmatpush1.msra.mxu0 %v1386
        %1446 = vmatprep.subr.mxu0 %v1383
        %1447 = vmatpush1.msra.mxu0 %v1382
        %1448 = vmatprep.subr.mxu0 %v1379
        %1449 = vmatpush1.msra.mxu0 %v1378
        %1450 = vmatprep.subr.mxu0 0.0
        %1451 = vmatpush2.msra.mxu0 0.0
        %1452 = vmatprep.subr.mxu0 0.0
        %1453 = vmatpush2.msra.mxu0 0.0
        %1454 = vmatprep.subr.mxu0 0.0
        %1455 = vmatpush2.msra.mxu0 0.0
        %1456 = vmatprep.subr.mxu0 0.0
        %1457 = vmatpush2.msra.mxu0 0.0
        %1458 = vmatprep.subr.mxu0 0.0
        %1459 = vmatpush2.msra.mxu0 0.0
        %1460 = vmatprep.subr.mxu0 0.0
        %1461 = vmatpush2.msra.mxu0 0.0
        %1462 = vmatprep.subr.mxu0 0.0
        %1463 = vmatpush2.msra.mxu0 0.0
        %1464 = vmatprep.subr.mxu0 0.0
        %1465 = vmatpush2.msra.mxu0 0.0
        %1466 = vmatprep.subr.mxu0 0.0
        %1467 = vmatpush2.msra.mxu0 0.0
        %1468 = vmatprep.subr.mxu0 0.0
        %1469 = vmatpush2.msra.mxu0 0.0
        %1470 = vmatprep.subr.mxu0 0.0
        %1471 = vmatpush2.msra.mxu0 0.0
        %1472 = vmatprep.subr.mxu0 0.0
        %1473 = vmatpush2.msra.mxu0 0.0
        %1474 = vmatprep.subr.mxu0 0.0
        %1475 = vmatpush2.msra.mxu0 0.0
        %1476 = vmatprep.subr.mxu0 0.0
        %1477 = vmatpush2.msra.mxu0 0.0
        %1478 = vmatprep.subr.mxu0 0.0
        %1479 = vmatpush2.msra.mxu0 0.0
        %1480 = vmatprep.subr.mxu0 0.0
        %1481 = vmatpush2.msra.mxu0 0.0
        %1482 = vmatprep.mubr.f32.mxu0 0.0
        %1483 = vmatmul.mubr.f32.gmra.mxu0 %v1416
        %v1484 = vpop.f32.mrf.mxu0
        %v1485 = vadd.f32 %v1413, %v1484
        %v1486 = vpop.f32.mrf.mxu0
        %v1487 = vadd.f32 %v1413, %v1486
        %1488 = vdwg.mxu0
        %v1489 = vmax.f32 %v1485, 0.0
        %v1490 = vmax.f32 %v1487, 0.0
        %v1491 = vld [vmem:[%s11] sm:$0xff]
        %v1492 = vld [vmem:[%s11 + $0x8] sm:$0xff]
        %v1494 = vsel %vm909, %v1491, 0
        %v1497 = vsel %vm909, %v1492, 0
        %1499 = vmatprep.subr.mxu0 0.0
        %1500 = vmatpush1.msra.mxu0 0.0
        %1501 = vmatprep.subr.mxu0 0.0
        %1502 = vmatpush1.msra.mxu0 0.0
        %1503 = vmatprep.subr.mxu0 0.0
        %1504 = vmatpush1.msra.mxu0 0.0
        %1505 = vmatprep.subr.mxu0 0.0
        %1506 = vmatpush1.msra.mxu0 0.0
        %1507 = vmatprep.subr.mxu0 0.0
        %1508 = vmatpush1.msra.mxu0 0.0
        %1509 = vmatprep.subr.mxu0 0.0
        %1510 = vmatpush1.msra.mxu0 0.0
        %1511 = vmatprep.subr.mxu0 0.0
        %1512 = vmatpush1.msra.mxu0 0.0
        %1513 = vmatprep.subr.mxu0 0.0
        %1514 = vmatpush1.msra.mxu0 0.0
        %1515 = vmatprep.subr.mxu0 0.0
        %1516 = vmatpush1.msra.mxu0 0.0
        %1517 = vmatprep.subr.mxu0 0.0
        %1518 = vmatpush1.msra.mxu0 0.0
        %1519 = vmatprep.subr.mxu0 0.0
        %1520 = vmatpush1.msra.mxu0 0.0
        %1521 = vmatprep.subr.mxu0 0.0
        %1522 = vmatpush1.msra.mxu0 0.0
        %1523 = vmatprep.subr.mxu0 0.0
        %1524 = vmatpush1.msra.mxu0 0.0
        %1525 = vmatprep.subr.mxu0 0.0
        %1526 = vmatpush1.msra.mxu0 0.0
        %1527 = vmatprep.subr.mxu0 0.0
        %1528 = vmatpush1.msra.mxu0 0.0
        %1529 = vmatprep.subr.mxu0 %v1490
        %1530 = vmatpush1.msra.mxu0 %v1489
        %1531 = vmatprep.subr.mxu0 0.0
        %1532 = vmatpush2.msra.mxu0 0.0
        %1533 = vmatprep.subr.mxu0 0.0
        %1534 = vmatpush2.msra.mxu0 0.0
        %1535 = vmatprep.subr.mxu0 0.0
        %1536 = vmatpush2.msra.mxu0 0.0
        %1537 = vmatprep.subr.mxu0 0.0
        %1538 = vmatpush2.msra.mxu0 0.0
        %1539 = vmatprep.subr.mxu0 0.0
        %1540 = vmatpush2.msra.mxu0 0.0
        %1541 = vmatprep.subr.mxu0 0.0
        %1542 = vmatpush2.msra.mxu0 0.0
        %1543 = vmatprep.subr.mxu0 0.0
        %1544 = vmatpush2.msra.mxu0 0.0
        %1545 = vmatprep.subr.mxu0 0.0
        %1546 = vmatpush2.msra.mxu0 0.0
        %1547 = vmatprep.subr.mxu0 0.0
        %1548 = vmatpush2.msra.mxu0 0.0
        %1549 = vmatprep.subr.mxu0 0.0
        %1550 = vmatpush2.msra.mxu0 0.0
        %1551 = vmatprep.subr.mxu0 0.0
        %1552 = vmatpush2.msra.mxu0 0.0
        %1553 = vmatprep.subr.mxu0 0.0
        %1554 = vmatpush2.msra.mxu0 0.0
        %1555 = vmatprep.subr.mxu0 0.0
        %1556 = vmatpush2.msra.mxu0 0.0
        %1557 = vmatprep.subr.mxu0 0.0
        %1558 = vmatpush2.msra.mxu0 0.0
        %1559 = vmatprep.subr.mxu0 0.0
        %1560 = vmatpush2.msra.mxu0 0.0
        %1561 = vmatprep.subr.mxu0 0.0
        %1562 = vmatpush2.msra.mxu0 0.0
        %1563 = vmatprep.mubr.f32.mxu0 0.0
        %1564 = vmatmul.mubr.f32.gmra.mxu0 %v1494
        %v1565 = vpop.f32.mrf.mxu0
        %v1566 = vadd.f32 0.0, %v1565
        %v1567 = vpop.f32.mrf.mxu0
        %v1568 = vadd.f32 0.0, %v1567
        %1569 = vmatprep.mubr.f32.mxu0 0.0
        %1570 = vmatmul.mubr.f32.gmra.mxu0 %v1497
        %v1571 = vpop.f32.mrf.mxu0
        %v1572 = vadd.f32 0.0, %v1571
        %v1573 = vpop.f32.mrf.mxu0
        %v1574 = vadd.f32 0.0, %v1573
        %1575 = vdwg.mxu0
        %v1576 = vadd.f32 %v1324, %v1566
        %v1577 = vadd.f32 %v1325, %v1568
        %v1578 = vadd.f32 %v1326, %v1572
        %v1579 = vadd.f32 %v1327, %v1574
        %v1580 = vld [vmem:[%s12] sm:$0xff]
        %v1581 = vld [vmem:[%s12 + $0x8] sm:$0xff]
        %1583 = vset.pattern.permute.xlu0 0
        %1584 = vperm.xlu0 %1583, %v1580
        %v1585 = vpop.permute.xlu0 %1584
        %1588 = vset.pattern.permute.xlu0 0
        %1589 = vperm.xlu0 %1588, %v1581
        %v1590 = vpop.permute.xlu0 %1589
        %v1592 = vadd.f32 %v1576, %v1585
        %v1593 = vadd.f32 %v1577, %v1585
        %v1594 = vadd.f32 %v1578, %v1590
        %v1595 = vadd.f32 %v1579, %v1590
        %v1596 = vmax.f32 %v1592, 0.0
        %v1597 = vmax.f32 %v1593, 0.0
        %v1598 = vmax.f32 %v1594, 0.0
        %v1599 = vmax.f32 %v1595, 0.0
        %1600 = vst [vmem:[%s433] sm:$0xff] %v1596
        %1601 = vst [vmem:[%s433 + $0x8] sm:$0xff] %v1597
        %1602 = vst [vmem:[%s433 + $0x10] sm:$0xff] %v1598
        %1603 = vst [vmem:[%s433 + $0x18] sm:$0xff] %v1599
        %s1604 = sand.u32 %s313, 1
        %s1605 = scalar_lea.sflag [#allocation3], %s1604
        %s1606 = sand.u32 %s313, 1
        %s1607 = smul.addr %s1606, 32
        %s1608 = scalar_lea.vmem [#allocation2], %s1607
        // Predicated region
        $region73: #{tpu_custom_call.1} parent=71 // pred_check
          %p1609 = pneg %p323
        $region74: #{tpu_custom_call.1} parent=71 // pred_check_branch
          %1611 = sbr.rel (%p1609) target = $region76
        $region75: #{tpu_custom_call.1} parent=71 // pred_region
          %s1613 = ssub.s32 512, 512
          %1614 = vsyncadd %s1605, %s1613
          %s1615 = smul.addr %s27, 4
          %s1616 = smul.addr %s1615, 128
          %s1617 = scalar_lea.hbm %s13, %s1616
          %s1618 = sshll.u32 %s1608, 4
          %s1619 = int_to_ptr.vmem [resolvable:$true] %s1618
          %1624 = dma.vmem_to_hbm [thread:$0]  %s1619, 512, %s1617, %s1605, 256, 256, 16
        $region76: #{tpu_custom_call.1} parent=71 // pred_fallthru
          _
      $region72: #{tpu_custom_call.1} parent=5 // pred_fallthru
        _
      %p1625 = scmp.le.s32.totalorder 2, %s22
      // Predicated region
      $region77: #{tpu_custom_call.1} parent=5 // pred_check
        %p1626 = pneg %p1625
      $region78: #{tpu_custom_call.1} parent=5 // pred_check_branch
        %1628 = sbr.rel (%p1626) target = $region80
      $region79: #{tpu_custom_call.1} parent=5 // pred_region
        %s1629 = ssub.s32 %s22, 2
        // Predicated region
        $region81: #{tpu_custom_call.1} parent=79 // pred_check
          %p1630 = pneg %p329
        $region82: #{tpu_custom_call.1} parent=79 // pred_check_branch
          %1632 = sbr.rel (%p1630) target = $region84
        $region83: #{tpu_custom_call.1} parent=79 // pred_region
          %s1633 = sand.u32 %s314, 1
          %s1634 = scalar_lea.sflag [#allocation3], %s1633
          %s1635 = sand.u32 %s314, 1
          %s1636 = smul.addr %s1635, 32
          %s1637 = scalar_lea.vmem [#allocation2], %s1636
          %1638 = dma.done %s1634, 512
        $region84: #{tpu_custom_call.1} parent=79 // pred_fallthru
          _
      $region80: #{tpu_custom_call.1} parent=5 // pred_fallthru
        _
    $region6: #{tpu_custom_call.1} parent=1 // loop_footer
      %s26 = sadd.s32 1, %s22
    $region7: #{tpu_custom_call.1} parent=1 // loop_footer_branch
      %21 = sbr.rel target = $region3
    $region8: #{tpu_custom_call.1} parent=1 // loop_exit
      _
    %1639 = vsyncpa [#allocation3], 1
    %s1640 = scalar_lea.sflag [#allocation3], 1
    %1641 = vsyncpa %s1640, 1

</llo_original>
